<compile_context>
chip_gen: v7x
topology: tpu7x:2x2x1
jax: 0.10.0
libtpu: 0.0.40
codegen_flags: <defaults>
</compile_context>

<pallas_src>
import jax
import jax.numpy as jnp
from jax.experimental import pallas as pl
from jax.experimental.pallas import tpu as pltpu


def _disc_kernel(x_ref, w1_ref, b1_ref, w2_ref, b2_ref, w3_ref, b3_ref, o_ref):
    # Shapes (tm = batch tile, batch on the lane axis):
    #   x_ref : (3, tm)    f32      w1_ref: (256, 3)   f32     b1_ref: (256, 1) f32
    #   w2_ref: (128, 256) bf16     b2_ref: (128, 1)   f32
    #   w3_ref: (128, 1)   f32      b3_ref: (1,)       f32 (SMEM scalar)
    #   o_ref : (1, tm)    f32
    x0 = x_ref[0:1, :]                                   # (1, tm)
    x1 = x_ref[1:2, :]
    x2 = x_ref[2:3, :]
    w1 = w1_ref[...]                                     # (256, 3)

    # --- Linear(3, 256) on the VPU: 3 broadcast FMAs (outer-product style) ---
    h1 = (w1[:, 0:1] * x0 + w1[:, 1:2] * x1 + w1[:, 2:3] * x2 + b1_ref[...])  # (256, tm)
    h1 = jnp.where(h1 > 0, h1, 0.2 * h1)                 # LeakyReLU(0.2)
    # Dropout(0.3): identity (eval mode)

    # --- Linear(256, 128): the only MXU matmul, bf16 operands / f32 accumulate ---
    h2 = jnp.dot(w2_ref[...], h1.astype(jnp.bfloat16),
                 preferred_element_type=jnp.float32)     # (128, tm) f32
    h2 = h2 + b2_ref[...]
    h2 = jnp.where(h2 > 0, h2, 0.2 * h2)                 # LeakyReLU(0.2)
    # Dropout(0.3): identity (eval mode)

    # --- Linear(128, 1): VPU multiply + sublane reduce -> already lane-dense ---
    h3 = jnp.sum(h2 * w3_ref[...], axis=0, keepdims=True) + b3_ref[0]   # (1, tm)

    # Sigmoid (f32)
    o_ref[...] = 1.0 / (1.0 + jnp.exp(-h3))


def _round_up(n, m):
    return ((n + m - 1) // m) * m


def discriminator_forward(x, params, *, tm=1024):
    """x: (B, 3) float32.  params: dict of w1,b1,w2,b2,w3,b3.  Returns (B, 1) f32."""
    B, F = x.shape
    assert F == 3

    # Batch tile: multiple of 128, no larger than the (lane-padded) batch.
    tm = max(128, _round_up(tm, 128))
    tm = min(tm, _round_up(B, 128))
    B_pad = _round_up(B, tm)
    n_tiles = B_pad // tm

    # Wrapper-side layout plumbing: batch goes on the lane axis.
    x_pad = jnp.pad(x.astype(jnp.float32), ((0, B_pad - B), (0, 0)))
    x_t = x_pad.T                                              # (3, B_pad)

    w1_t = params["w1"].T.astype(jnp.float32)                  # (256, 3)
    b1_c = params["b1"].reshape(256, 1).astype(jnp.float32)    # (256, 1)
    w2_t = params["w2"].T.astype(jnp.bfloat16)                 # (128, 256) bf16
    b2_c = params["b2"].reshape(128, 1).astype(jnp.float32)    # (128, 1)
    w3_c = params["w3"].reshape(128, 1).astype(jnp.float32)    # (128, 1)
    b3_s = params["b3"].reshape(1).astype(jnp.float32)         # (1,) scalar -> SMEM

    def full(shape):
        # Grid-invariant full-array block (Pallas skips re-DMA across steps).
        return pl.BlockSpec(shape, lambda i: (0, 0))

    out = pl.pallas_call(
        _disc_kernel,
        out_shape=jax.ShapeDtypeStruct((1, B_pad), jnp.float32),
        grid=(n_tiles,),
        in_specs=[
            pl.BlockSpec((3, tm), lambda i: (0, i)),           # x tile (batch on lanes)
            full(w1_t.shape), full(b1_c.shape),
            full(w2_t.shape), full(b2_c.shape),
            full(w3_c.shape),
            pl.BlockSpec(memory_space=pltpu.MemorySpace.SMEM),  # b3 scalar
        ],
        out_specs=pl.BlockSpec((1, tm), lambda i: (0, i)),      # lane-dense output
        compiler_params=pltpu.CompilerParams(
            dimension_semantics=("parallel",),
        ),
    )(x_t, w1_t, b1_c, w2_t, b2_c, w3_c, b3_s)

    return out.reshape(B_pad, 1)[:B]


def init_params(key):
    """nn.Linear default init: U(-1/sqrt(fan_in), +1/sqrt(fan_in)) for W and b."""
    ks = jax.random.split(key, 6)

    def linear(kw, kb, fan_in, fan_out):
        bound = 1.0 / (fan_in ** 0.5)
        w = jax.random.uniform(kw, (fan_in, fan_out), jnp.float32, -bound, bound)
        b = jax.random.uniform(kb, (fan_out,), jnp.float32, -bound, bound)
        return w, b

    w1, b1 = linear(ks[0], ks[1], 3, 256)
    w2, b2 = linear(ks[2], ks[3], 256, 128)
    w3, b3 = linear(ks[4], ks[5], 128, 1)
    return {"w1": w1, "b1": b1, "w2": w2, "b2": b2, "w3": w3, "b3": b3}


def _reference(x, p):
    h1 = x @ p["w1"] + p["b1"]
    h1 = jnp.where(h1 > 0, h1, 0.2 * h1)
    h2 = h1 @ p["w2"] + p["b2"]
    h2 = jnp.where(h2 > 0, h2, 0.2 * h2)
    h3 = h2 @ p["w3"] + p["b3"]
    return jax.nn.sigmoid(h3)


if __name__ == "__main__":
    key = jax.random.PRNGKey(0)
    k_param, k_x = jax.random.split(key)

    params = init_params(k_param)
    B = 300                                    # non-multiple of 128 -> exercises padding path
    x = jax.random.normal(k_x, (B, 3), jnp.float32)

    out = discriminator_forward(x, params)
    out = jax.block_until_ready(out)

    ref = _reference(x, params)
    assert out.shape == (B, 1)
    # Layer-2 matmul uses bf16 operands with f32 accumulation -> small tolerance
    # against the pure-f32 reference.
    assert jnp.allclose(out, ref, atol=1e-2, rtol=1e-2), "mismatch vs pure-JAX reference"

    print("KERNEL_OK")
</pallas_src>

<mosaic_0001>
module attributes {stable_mosaic.version = 11 : i64} {
  func.func @_disc_kernel(%arg0: i32, %arg1: memref<3x384xf32, #tpu.memory_space<vmem>>, %arg2: memref<256x3xf32, #tpu.memory_space<vmem>>, %arg3: memref<256x1xf32, #tpu.memory_space<vmem>>, %arg4: memref<128x256xbf16, #tpu.memory_space<vmem>>, %arg5: memref<128x1xf32, #tpu.memory_space<vmem>>, %arg6: memref<128x1xf32, #tpu.memory_space<vmem>>, %arg7: memref<1xf32, #tpu.memory_space<smem>>, %arg8: memref<1x384xf32, #tpu.memory_space<vmem>>) attributes {dimension_semantics = [#tpu.dimension_semantics<parallel>], iteration_bounds = array<i64: 1>, scalar_prefetch = 0 : i64, scratch_operands = 0 : i64, tpu.core_type = #tpu.core_type<tc>, window_params = [{transform_indices = @transform_0, window_bounds = array<i64: 3, 384>}, {pipeline_mode = #tpu.pipeline_mode<synchronous>, transform_indices = @transform_1, window_bounds = array<i64: 256, 3>}, {pipeline_mode = #tpu.pipeline_mode<synchronous>, transform_indices = @transform_2, window_bounds = array<i64: 256, 1>}, {pipeline_mode = #tpu.pipeline_mode<synchronous>, transform_indices = @transform_3, window_bounds = array<i64: 128, 256>}, {pipeline_mode = #tpu.pipeline_mode<synchronous>, transform_indices = @transform_4, window_bounds = array<i64: 128, 1>}, {pipeline_mode = #tpu.pipeline_mode<synchronous>, transform_indices = @transform_5, window_bounds = array<i64: 128, 1>}, {transform_indices = @transform_6, window_bounds = array<i64: 1>}, {transform_indices = @transform_7, window_bounds = array<i64: 1, 384>}]} {
    %c0 = arith.constant 0 : index
    %c0_0 = arith.constant 0 : index
    %0 = vector.load %arg1[%c0, %c0_0] : memref<3x384xf32, #tpu.memory_space<vmem>>, vector<1x384xf32>
    %c1 = arith.constant 1 : index
    %c0_1 = arith.constant 0 : index
    %1 = vector.load %arg1[%c1, %c0_1] : memref<3x384xf32, #tpu.memory_space<vmem>>, vector<1x384xf32>
    %c2 = arith.constant 2 : index
    %c0_2 = arith.constant 0 : index
    %2 = vector.load %arg1[%c2, %c0_2] : memref<3x384xf32, #tpu.memory_space<vmem>>, vector<1x384xf32>
    %c0_3 = arith.constant 0 : index
    %c0_4 = arith.constant 0 : index
    %3 = vector.load %arg2[%c0_3, %c0_4] : memref<256x3xf32, #tpu.memory_space<vmem>>, vector<256x3xf32>
    %4 = vector.extract_strided_slice %3 {offsets = [0, 0], sizes = [256, 1], strides = [1, 1]} : vector<256x3xf32> to vector<256x1xf32>
    %5 = vector.broadcast %4 : vector<256x1xf32> to vector<256x384xf32>
    %6 = vector.broadcast %0 : vector<1x384xf32> to vector<256x384xf32>
    %7 = arith.mulf %5, %6 : vector<256x384xf32>
    %8 = vector.extract_strided_slice %3 {offsets = [0, 1], sizes = [256, 1], strides = [1, 1]} : vector<256x3xf32> to vector<256x1xf32>
    %9 = vector.broadcast %8 : vector<256x1xf32> to vector<256x384xf32>
    %10 = vector.broadcast %1 : vector<1x384xf32> to vector<256x384xf32>
    %11 = arith.mulf %9, %10 : vector<256x384xf32>
    %12 = arith.addf %7, %11 : vector<256x384xf32>
    %13 = vector.extract_strided_slice %3 {offsets = [0, 2], sizes = [256, 1], strides = [1, 1]} : vector<256x3xf32> to vector<256x1xf32>
    %14 = vector.broadcast %13 : vector<256x1xf32> to vector<256x384xf32>
    %15 = vector.broadcast %2 : vector<1x384xf32> to vector<256x384xf32>
    %16 = arith.mulf %14, %15 : vector<256x384xf32>
    %17 = arith.addf %12, %16 : vector<256x384xf32>
    %c0_5 = arith.constant 0 : index
    %c0_6 = arith.constant 0 : index
    %18 = vector.load %arg3[%c0_5, %c0_6] : memref<256x1xf32, #tpu.memory_space<vmem>>, vector<256x1xf32>
    %19 = vector.broadcast %18 : vector<256x1xf32> to vector<256x384xf32>
    %20 = arith.addf %17, %19 : vector<256x384xf32>
    %cst = arith.constant 0.000000e+00 : f32
    %21 = vector.broadcast %cst : f32 to vector<256x384xf32>
    %22 = arith.cmpf ogt, %20, %21 : vector<256x384xf32>
    %cst_7 = arith.constant 2.000000e-01 : f32
    %23 = vector.broadcast %cst_7 : f32 to vector<256x384xf32>
    %24 = arith.mulf %23, %20 : vector<256x384xf32>
    %25 = arith.select %22, %20, %24 : vector<256x384xi1>, vector<256x384xf32>
    %c0_8 = arith.constant 0 : index
    %c0_9 = arith.constant 0 : index
    %26 = vector.load %arg4[%c0_8, %c0_9] : memref<128x256xbf16, #tpu.memory_space<vmem>>, vector<128x256xbf16>
    %27 = arith.truncf %25 : vector<256x384xf32> to vector<256x384xbf16>
    %cst_10 = arith.constant dense<0.000000e+00> : vector<128x384xf32>
    %28 = tpu.matmul %26, %27, %cst_10 {dimension_numbers = #tpu.dot_dimension_numbers<[1], [0], [0], [1], [0, 0, 1, 1], [], []>} : vector<128x256xbf16>, vector<256x384xbf16>, vector<128x384xf32> -> vector<128x384xf32>
    %c0_11 = arith.constant 0 : index
    %c0_12 = arith.constant 0 : index
    %29 = vector.load %arg5[%c0_11, %c0_12] : memref<128x1xf32, #tpu.memory_space<vmem>>, vector<128x1xf32>
    %30 = vector.broadcast %29 : vector<128x1xf32> to vector<128x384xf32>
    %31 = arith.addf %28, %30 : vector<128x384xf32>
    %cst_13 = arith.constant 0.000000e+00 : f32
    %32 = vector.broadcast %cst_13 : f32 to vector<128x384xf32>
    %33 = arith.cmpf ogt, %31, %32 : vector<128x384xf32>
    %cst_14 = arith.constant 2.000000e-01 : f32
    %34 = vector.broadcast %cst_14 : f32 to vector<128x384xf32>
    %35 = arith.mulf %34, %31 : vector<128x384xf32>
    %36 = arith.select %33, %31, %35 : vector<128x384xi1>, vector<128x384xf32>
    %c0_15 = arith.constant 0 : index
    %c0_16 = arith.constant 0 : index
    %37 = vector.load %arg6[%c0_15, %c0_16] : memref<128x1xf32, #tpu.memory_space<vmem>>, vector<128x1xf32>
    %38 = vector.broadcast %37 : vector<128x1xf32> to vector<128x384xf32>
    %39 = arith.mulf %36, %38 : vector<128x384xf32>
    %cst_17 = arith.constant dense<0.000000e+00> : vector<384xf32>
    %40 = vector.multi_reduction <add>, %39, %cst_17 [0] : vector<128x384xf32> to vector<384xf32>
    %41 = vector.shape_cast %40 : vector<384xf32> to vector<1x384xf32>
    %c0_18 = arith.constant 0 : index
    %42 = memref.load %arg7[%c0_18] : memref<1xf32, #tpu.memory_space<smem>>
    %43 = vector.broadcast %42 : f32 to vector<1x384xf32>
    %44 = arith.addf %41, %43 : vector<1x384xf32>
    %cst_19 = arith.constant 0.000000e+00 : f32
    %45 = vector.broadcast %cst_19 : f32 to vector<1x384xf32>
    %46 = arith.subf %45, %44 : vector<1x384xf32>
    %47 = math.exp %46 : vector<1x384xf32>
    %cst_20 = arith.constant 1.000000e+00 : f32
    %48 = vector.broadcast %cst_20 : f32 to vector<1x384xf32>
    %49 = arith.addf %48, %47 : vector<1x384xf32>
    %cst_21 = arith.constant 1.000000e+00 : f32
    %50 = vector.broadcast %cst_21 : f32 to vector<1x384xf32>
    %51 = arith.divf %50, %49 : vector<1x384xf32>
    %c0_22 = arith.constant 0 : index
    %c0_23 = arith.constant 0 : index
    %52 = vector.load %arg8[%c0_22, %c0_23] : memref<1x384xf32, #tpu.memory_space<vmem>>, vector<1x384xf32>
    tpu.vector_store %arg8[%c0_22, %c0_23], %51 {strides = array<i32>} : memref<1x384xf32, #tpu.memory_space<vmem>>, vector<1x384xf32>,
    return
  }
  func.func @transform_0(%arg0: i32) -> (i32, i32) {
    %c0_i32 = arith.constant 0 : i32
    %c0_i32_0 = arith.constant 0 : i32
    return %c0_i32, %arg0 : i32, i32
  }
  func.func @transform_1(%arg0: i32) -> (i32, i32) {
    %c0_i32 = arith.constant 0 : i32
    %c0_i32_0 = arith.constant 0 : i32
    %c0_i32_1 = arith.constant 0 : i32
    return %c0_i32, %c0_i32_0 : i32, i32
  }
  func.func @transform_2(%arg0: i32) -> (i32, i32) {
    %c0_i32 = arith.constant 0 : i32
    %c0_i32_0 = arith.constant 0 : i32
    %c0_i32_1 = arith.constant 0 : i32
    return %c0_i32, %c0_i32_0 : i32, i32
  }
  func.func @transform_3(%arg0: i32) -> (i32, i32) {
    %c0_i32 = arith.constant 0 : i32
    %c0_i32_0 = arith.constant 0 : i32
    %c0_i32_1 = arith.constant 0 : i32
    return %c0_i32, %c0_i32_0 : i32, i32
  }
  func.func @transform_4(%arg0: i32) -> (i32, i32) {
    %c0_i32 = arith.constant 0 : i32
    %c0_i32_0 = arith.constant 0 : i32
    %c0_i32_1 = arith.constant 0 : i32
    return %c0_i32, %c0_i32_0 : i32, i32
  }
  func.func @transform_5(%arg0: i32) -> (i32, i32) {
    %c0_i32 = arith.constant 0 : i32
    %c0_i32_0 = arith.constant 0 : i32
    %c0_i32_1 = arith.constant 0 : i32
    return %c0_i32, %c0_i32_0 : i32, i32
  }
  func.func @transform_6(%arg0: i32) -> i32 {
    %c0_i32 = arith.constant 0 : i32
    %c0_i32_0 = arith.constant 0 : i32
    return %c0_i32 : i32
  }
  func.func @transform_7(%arg0: i32) -> (i32, i32) {
    %c0_i32 = arith.constant 0 : i32
    %c0_i32_0 = arith.constant 0 : i32
    return %c0_i32, %arg0 : i32, i32
  }
}

</mosaic_0001>

<llo_original>
// kernel: tpu_custom_call.1
$region0: #{tpu_custom_call.1}
  #allocation0 [shape = 'u32[]', space=smem, size = 0x4, offset = 0x4, fixed_abs, tag = 'smem constant byte address 0x4 - core index']
  #allocation1 [shape = 'u32[144,128]{1,0:T(1,128)}', space=vmem, size = 0x12000, scoped, tag = 'internal scratch']
  #allocation2 [shape = 'f32[1]{0:T(128)S(6)}', space=smem, size = 0x200, scoped, tag = 'scoped memory for tpu_custom_call.1']
  %s0 = inlined_call_operand.vmem [shape: f32[3,384], index: 0, kind: input, shape index: {}]
  %s1 = inlined_call_operand.vmem [shape: f32[256,3], index: 1, kind: input, shape index: {}]
  %s2 = inlined_call_operand.vmem [shape: f32[256,1], index: 2, kind: input, shape index: {}]
  %s3 = inlined_call_operand.vmem [shape: bf16[128,256], index: 3, kind: input, shape index: {}]
  %s4 = inlined_call_operand.vmem [shape: f32[128,1], index: 4, kind: input, shape index: {}]
  %s5 = inlined_call_operand.vmem [shape: f32[128,1], index: 5, kind: input, shape index: {}]
  %s6 = inlined_call_operand.<no memory space> [shape: f32[1], index: 6, kind: input, shape index: {}]
  %s7 = inlined_call_operand.hbm [shape: f32[1,384], index: 7, kind: output, shape index: {}]
  %s8 = sld [smem:[#allocation0]]
  $region38: #{tpu_custom_call.1} parent=0
    _
  %s10 = ssub.s32 1, %s8
  %s11 = scalar_select 0, %s10, %s8
  %12 = sst [smem:[#allocation2]] %s6
  $region1: #{tpu_custom_call.1} parent=0
    #allocation3 [shape = 'u8[1536]{0}', space=vmem, size = 0x800, scoped, tag = 'output window, operand 0, single buffered']
    #allocation4 [shape = 's32[1]{0}', space=sflag, size = 0x4, scoped, tag = 'scoped memory for tpu_custom_call.1']
    %13 = vsyncpa [#allocation4], 0
    // Predicated region
    $region2: #{tpu_custom_call.1} parent=1 // pred_check
      _
    $region3: #{tpu_custom_call.1} parent=1 // pred_check_branch
      %15 = sbr.rel (0) target = $region5
    $region4: #{tpu_custom_call.1} parent=1 // pred_region
      _
    $region5: #{tpu_custom_call.1} parent=1 // pred_fallthru
      _
    // Predicated region
    $region6: #{tpu_custom_call.1} parent=1 // pred_check
      _
    $region7: #{tpu_custom_call.1} parent=1 // pred_check_branch
      %17 = sbr.rel (0) target = $region9
    $region8: #{tpu_custom_call.1} parent=1 // pred_region
      _
    $region9: #{tpu_custom_call.1} parent=1 // pred_fallthru
      _
    // Predicated region
    $region10: #{tpu_custom_call.1} parent=1 // pred_check
      _
    $region11: #{tpu_custom_call.1} parent=1 // pred_check_branch
      %19 = sbr.rel (0) target = $region13
    $region12: #{tpu_custom_call.1} parent=1 // pred_region
      _
    $region13: #{tpu_custom_call.1} parent=1 // pred_fallthru
      _
    // Predicated region
    $region14: #{tpu_custom_call.1} parent=1 // pred_check
      _
    $region15: #{tpu_custom_call.1} parent=1 // pred_check_branch
      %21 = sbr.rel (0) target = $region17
    $region16: #{tpu_custom_call.1} parent=1 // pred_region
      _
    $region17: #{tpu_custom_call.1} parent=1 // pred_fallthru
      _
    // Predicated region
    $region18: #{tpu_custom_call.1} parent=1 // pred_check
      _
    $region19: #{tpu_custom_call.1} parent=1 // pred_check_branch
      %23 = sbr.rel (0) target = $region21
    $region20: #{tpu_custom_call.1} parent=1 // pred_region
      _
    $region21: #{tpu_custom_call.1} parent=1 // pred_fallthru
      _
    // Predicated region
    $region22: #{tpu_custom_call.1} parent=1 // pred_check
      _
    $region23: #{tpu_custom_call.1} parent=1 // pred_check_branch
      %25 = sbr.rel (0) target = $region25
    $region24: #{tpu_custom_call.1} parent=1 // pred_region
      _
    $region25: #{tpu_custom_call.1} parent=1 // pred_fallthru
      _
    // Predicated region
    $region26: #{tpu_custom_call.1} parent=1 // pred_check
      _
    $region27: #{tpu_custom_call.1} parent=1 // pred_check_branch
      %27 = sbr.rel (0) target = $region29
    $region28: #{tpu_custom_call.1} parent=1 // pred_region
      _
    $region29: #{tpu_custom_call.1} parent=1 // pred_fallthru
      _
    %v29 = vld [vmem:[%s0] ss:$4 sm:$0x7]
    %s30 = scalar_lea.vmem %s0, 1
    %v31 = vld [vmem:[%s30] ss:$4 sm:$0x7]
    %s32 = scalar_lea.vmem %s0, 2
    %v33 = vld [vmem:[%s32] ss:$4 sm:$0x7]
    %v34 = vld [vmem:[%s1] sm:$0xff]
    %v35 = vld [vmem:[%s1 + $0x8] sm:$0xff]
    %v36 = vld [vmem:[%s1 + $0x10] sm:$0xff]
    %v37 = vld [vmem:[%s1 + $0x18] sm:$0xff]
    %v38 = vld [vmem:[%s1 + $0x20] sm:$0xff]
    %v39 = vld [vmem:[%s1 + $0x28] sm:$0xff]
    %v40 = vld [vmem:[%s1 + $0x30] sm:$0xff]
    %v41 = vld [vmem:[%s1 + $0x38] sm:$0xff]
    %v42 = vld [vmem:[%s1 + $0x40] sm:$0xff]
    %v43 = vld [vmem:[%s1 + $0x48] sm:$0xff]
    %v44 = vld [vmem:[%s1 + $0x50] sm:$0xff]
    %v45 = vld [vmem:[%s1 + $0x58] sm:$0xff]
    %v46 = vld [vmem:[%s1 + $0x60] sm:$0xff]
    %v47 = vld [vmem:[%s1 + $0x68] sm:$0xff]
    %v48 = vld [vmem:[%s1 + $0x70] sm:$0xff]
    %v49 = vld [vmem:[%s1 + $0x78] sm:$0xff]
    %v50 = vld [vmem:[%s1 + $0x80] sm:$0xff]
    %v51 = vld [vmem:[%s1 + $0x88] sm:$0xff]
    %v52 = vld [vmem:[%s1 + $0x90] sm:$0xff]
    %v53 = vld [vmem:[%s1 + $0x98] sm:$0xff]
    %v54 = vld [vmem:[%s1 + $0xa0] sm:$0xff]
    %v55 = vld [vmem:[%s1 + $0xa8] sm:$0xff]
    %v56 = vld [vmem:[%s1 + $0xb0] sm:$0xff]
    %v57 = vld [vmem:[%s1 + $0xb8] sm:$0xff]
    %v58 = vld [vmem:[%s1 + $0xc0] sm:$0xff]
    %v59 = vld [vmem:[%s1 + $0xc8] sm:$0xff]
    %v60 = vld [vmem:[%s1 + $0xd0] sm:$0xff]
    %v61 = vld [vmem:[%s1 + $0xd8] sm:$0xff]
    %v62 = vld [vmem:[%s1 + $0xe0] sm:$0xff]
    %v63 = vld [vmem:[%s1 + $0xe8] sm:$0xff]
    %v64 = vld [vmem:[%s1 + $0xf0] sm:$0xff]
    %v65 = vld [vmem:[%s1 + $0xf8] sm:$0xff]
    %67 = vset.pattern.permute.xlu0 0
    %68 = vperm.xlu0 %67, %v34
    %v69 = vpop.permute.xlu0 %68
    %72 = vset.pattern.permute.xlu0 0
    %73 = vperm.xlu0 %72, %v35
    %v74 = vpop.permute.xlu0 %73
    %77 = vset.pattern.permute.xlu0 0
    %78 = vperm.xlu0 %77, %v36
    %v79 = vpop.permute.xlu0 %78
    %82 = vset.pattern.permute.xlu0 0
    %83 = vperm.xlu0 %82, %v37
    %v84 = vpop.permute.xlu0 %83
    %87 = vset.pattern.permute.xlu0 0
    %88 = vperm.xlu0 %87, %v38
    %v89 = vpop.permute.xlu0 %88
    %92 = vset.pattern.permute.xlu0 0
    %93 = vperm.xlu0 %92, %v39
    %v94 = vpop.permute.xlu0 %93
    %97 = vset.pattern.permute.xlu0 0
    %98 = vperm.xlu0 %97, %v40
    %v99 = vpop.permute.xlu0 %98
    %102 = vset.pattern.permute.xlu0 0
    %103 = vperm.xlu0 %102, %v41
    %v104 = vpop.permute.xlu0 %103
    %107 = vset.pattern.permute.xlu0 0
    %108 = vperm.xlu0 %107, %v42
    %v109 = vpop.permute.xlu0 %108
    %112 = vset.pattern.permute.xlu0 0
    %113 = vperm.xlu0 %112, %v43
    %v114 = vpop.permute.xlu0 %113
    %117 = vset.pattern.permute.xlu0 0
    %118 = vperm.xlu0 %117, %v44
    %v119 = vpop.permute.xlu0 %118
    %122 = vset.pattern.permute.xlu0 0
    %123 = vperm.xlu0 %122, %v45
    %v124 = vpop.permute.xlu0 %123
    %127 = vset.pattern.permute.xlu0 0
    %128 = vperm.xlu0 %127, %v46
    %v129 = vpop.permute.xlu0 %128
    %132 = vset.pattern.permute.xlu0 0
    %133 = vperm.xlu0 %132, %v47
    %v134 = vpop.permute.xlu0 %133
    %137 = vset.pattern.permute.xlu0 0
    %138 = vperm.xlu0 %137, %v48
    %v139 = vpop.permute.xlu0 %138
    %142 = vset.pattern.permute.xlu0 0
    %143 = vperm.xlu0 %142, %v49
    %v144 = vpop.permute.xlu0 %143
    %147 = vset.pattern.permute.xlu0 0
    %148 = vperm.xlu0 %147, %v50
    %v149 = vpop.permute.xlu0 %148
    %152 = vset.pattern.permute.xlu0 0
    %153 = vperm.xlu0 %152, %v51
    %v154 = vpop.permute.xlu0 %153
    %157 = vset.pattern.permute.xlu0 0
    %158 = vperm.xlu0 %157, %v52
    %v159 = vpop.permute.xlu0 %158
    %162 = vset.pattern.permute.xlu0 0
    %163 = vperm.xlu0 %162, %v53
    %v164 = vpop.permute.xlu0 %163
    %167 = vset.pattern.permute.xlu0 0
    %168 = vperm.xlu0 %167, %v54
    %v169 = vpop.permute.xlu0 %168
    %172 = vset.pattern.permute.xlu0 0
    %173 = vperm.xlu0 %172, %v55
    %v174 = vpop.permute.xlu0 %173
    %177 = vset.pattern.permute.xlu0 0
    %178 = vperm.xlu0 %177, %v56
    %v179 = vpop.permute.xlu0 %178
    %182 = vset.pattern.permute.xlu0 0
    %183 = vperm.xlu0 %182, %v57
    %v184 = vpop.permute.xlu0 %183
    %187 = vset.pattern.permute.xlu0 0
    %188 = vperm.xlu0 %187, %v58
    %v189 = vpop.permute.xlu0 %188
    %192 = vset.pattern.permute.xlu0 0
    %193 = vperm.xlu0 %192, %v59
    %v194 = vpop.permute.xlu0 %193
    %197 = vset.pattern.permute.xlu0 0
    %198 = vperm.xlu0 %197, %v60
    %v199 = vpop.permute.xlu0 %198
    %202 = vset.pattern.permute.xlu0 0
    %203 = vperm.xlu0 %202, %v61
    %v204 = vpop.permute.xlu0 %203
    %207 = vset.pattern.permute.xlu0 0
    %208 = vperm.xlu0 %207, %v62
    %v209 = vpop.permute.xlu0 %208
    %212 = vset.pattern.permute.xlu0 0
    %213 = vperm.xlu0 %212, %v63
    %v214 = vpop.permute.xlu0 %213
    %217 = vset.pattern.permute.xlu0 0
    %218 = vperm.xlu0 %217, %v64
    %v219 = vpop.permute.xlu0 %218
    %222 = vset.pattern.permute.xlu0 0
    %223 = vperm.xlu0 %222, %v65
    %v224 = vpop.permute.xlu0 %223
    %v227 = vlaneseq
    %v228 = vshrl.u32 %v227, 7
    %v229 = vsub.s32 0, %v228
    %v230 = vrot.slane %v29, %v229
    %v231 = vlaneseq
    %v232 = vshrl.u32 %v231, 7
    %v233 = vsub.s32 1, %v232
    %v234 = vrot.slane %v29, %v233
    %v235 = vlaneseq
    %v236 = vshrl.u32 %v235, 7
    %v237 = vsub.s32 2, %v236
    %v238 = vrot.slane %v29, %v237
    %v242 = vmul.f32 %v69, %v230
    %v243 = vmul.f32 %v69, %v234
    %v244 = vmul.f32 %v69, %v238
    %v245 = vmul.f32 %v74, %v230
    %v246 = vmul.f32 %v74, %v234
    %v247 = vmul.f32 %v74, %v238
    %v248 = vmul.f32 %v79, %v230
    %v249 = vmul.f32 %v79, %v234
    %v250 = vmul.f32 %v79, %v238
    %v251 = vmul.f32 %v84, %v230
    %v252 = vmul.f32 %v84, %v234
    %v253 = vmul.f32 %v84, %v238
    %v254 = vmul.f32 %v89, %v230
    %v255 = vmul.f32 %v89, %v234
    %v256 = vmul.f32 %v89, %v238
    %v257 = vmul.f32 %v94, %v230
    %v258 = vmul.f32 %v94, %v234
    %v259 = vmul.f32 %v94, %v238
    %v260 = vmul.f32 %v99, %v230
    %v261 = vmul.f32 %v99, %v234
    %v262 = vmul.f32 %v99, %v238
    %v263 = vmul.f32 %v104, %v230
    %v264 = vmul.f32 %v104, %v234
    %v265 = vmul.f32 %v104, %v238
    %v266 = vmul.f32 %v109, %v230
    %v267 = vmul.f32 %v109, %v234
    %v268 = vmul.f32 %v109, %v238
    %v269 = vmul.f32 %v114, %v230
    %v270 = vmul.f32 %v114, %v234
    %v271 = vmul.f32 %v114, %v238
    %v272 = vmul.f32 %v119, %v230
    %v273 = vmul.f32 %v119, %v234
    %v274 = vmul.f32 %v119, %v238
    %v275 = vmul.f32 %v124, %v230
    %v276 = vmul.f32 %v124, %v234
    %v277 = vmul.f32 %v124, %v238
    %v278 = vmul.f32 %v129, %v230
    %v279 = vmul.f32 %v129, %v234
    %v280 = vmul.f32 %v129, %v238
    %v281 = vmul.f32 %v134, %v230
    %v282 = vmul.f32 %v134, %v234
    %v283 = vmul.f32 %v134, %v238
    %v284 = vmul.f32 %v139, %v230
    %v285 = vmul.f32 %v139, %v234
    %v286 = vmul.f32 %v139, %v238
    %v287 = vmul.f32 %v144, %v230
    %v288 = vmul.f32 %v144, %v234
    %v289 = vmul.f32 %v144, %v238
    %v290 = vmul.f32 %v149, %v230
    %v291 = vmul.f32 %v149, %v234
    %v292 = vmul.f32 %v149, %v238
    %v293 = vmul.f32 %v154, %v230
    %v294 = vmul.f32 %v154, %v234
    %v295 = vmul.f32 %v154, %v238
    %v296 = vmul.f32 %v159, %v230
    %v297 = vmul.f32 %v159, %v234
    %v298 = vmul.f32 %v159, %v238
    %v299 = vmul.f32 %v164, %v230
    %v300 = vmul.f32 %v164, %v234
    %v301 = vmul.f32 %v164, %v238
    %v302 = vmul.f32 %v169, %v230
    %v303 = vmul.f32 %v169, %v234
    %v304 = vmul.f32 %v169, %v238
    %v305 = vmul.f32 %v174, %v230
    %v306 = vmul.f32 %v174, %v234
    %v307 = vmul.f32 %v174, %v238
    %v308 = vmul.f32 %v179, %v230
    %v309 = vmul.f32 %v179, %v234
    %v310 = vmul.f32 %v179, %v238
    %v311 = vmul.f32 %v184, %v230
    %v312 = vmul.f32 %v184, %v234
    %v313 = vmul.f32 %v184, %v238
    %v314 = vmul.f32 %v189, %v230
    %v315 = vmul.f32 %v189, %v234
    %v316 = vmul.f32 %v189, %v238
    %v317 = vmul.f32 %v194, %v230
    %v318 = vmul.f32 %v194, %v234
    %v319 = vmul.f32 %v194, %v238
    %v320 = vmul.f32 %v199, %v230
    %v321 = vmul.f32 %v199, %v234
    %v322 = vmul.f32 %v199, %v238
    %v323 = vmul.f32 %v204, %v230
    %v324 = vmul.f32 %v204, %v234
    %v325 = vmul.f32 %v204, %v238
    %v326 = vmul.f32 %v209, %v230
    %v327 = vmul.f32 %v209, %v234
    %v328 = vmul.f32 %v209, %v238
    %v329 = vmul.f32 %v214, %v230
    %v330 = vmul.f32 %v214, %v234
    %v331 = vmul.f32 %v214, %v238
    %v332 = vmul.f32 %v219, %v230
    %v333 = vmul.f32 %v219, %v234
    %v334 = vmul.f32 %v219, %v238
    %v335 = vmul.f32 %v224, %v230
    %v336 = vmul.f32 %v224, %v234
    %v337 = vmul.f32 %v224, %v238
    %338 = vset.pattern.permute.xlu0 1
    %339 = vperm.xlu0 %338, %v34
    %v340 = vpop.permute.xlu0 %339
    %342 = vset.pattern.permute.xlu0 1
    %343 = vperm.xlu0 %342, %v35
    %v344 = vpop.permute.xlu0 %343
    %346 = vset.pattern.permute.xlu0 1
    %347 = vperm.xlu0 %346, %v36
    %v348 = vpop.permute.xlu0 %347
    %350 = vset.pattern.permute.xlu0 1
    %351 = vperm.xlu0 %350, %v37
    %v352 = vpop.permute.xlu0 %351
    %354 = vset.pattern.permute.xlu0 1
    %355 = vperm.xlu0 %354, %v38
    %v356 = vpop.permute.xlu0 %355
    %358 = vset.pattern.permute.xlu0 1
    %359 = vperm.xlu0 %358, %v39
    %v360 = vpop.permute.xlu0 %359
    %362 = vset.pattern.permute.xlu0 1
    %363 = vperm.xlu0 %362, %v40
    %v364 = vpop.permute.xlu0 %363
    %366 = vset.pattern.permute.xlu0 1
    %367 = vperm.xlu0 %366, %v41
    %v368 = vpop.permute.xlu0 %367
    %370 = vset.pattern.permute.xlu0 1
    %371 = vperm.xlu0 %370, %v42
    %v372 = vpop.permute.xlu0 %371
    %374 = vset.pattern.permute.xlu0 1
    %375 = vperm.xlu0 %374, %v43
    %v376 = vpop.permute.xlu0 %375
    %378 = vset.pattern.permute.xlu0 1
    %379 = vperm.xlu0 %378, %v44
    %v380 = vpop.permute.xlu0 %379
    %382 = vset.pattern.permute.xlu0 1
    %383 = vperm.xlu0 %382, %v45
    %v384 = vpop.permute.xlu0 %383
    %386 = vset.pattern.permute.xlu0 1
    %387 = vperm.xlu0 %386, %v46
    %v388 = vpop.permute.xlu0 %387
    %390 = vset.pattern.permute.xlu0 1
    %391 = vperm.xlu0 %390, %v47
    %v392 = vpop.permute.xlu0 %391
    %394 = vset.pattern.permute.xlu0 1
    %395 = vperm.xlu0 %394, %v48
    %v396 = vpop.permute.xlu0 %395
    %398 = vset.pattern.permute.xlu0 1
    %399 = vperm.xlu0 %398, %v49
    %v400 = vpop.permute.xlu0 %399
    %402 = vset.pattern.permute.xlu0 1
    %403 = vperm.xlu0 %402, %v50
    %v404 = vpop.permute.xlu0 %403
    %406 = vset.pattern.permute.xlu0 1
    %407 = vperm.xlu0 %406, %v51
    %v408 = vpop.permute.xlu0 %407
    %410 = vset.pattern.permute.xlu0 1
    %411 = vperm.xlu0 %410, %v52
    %v412 = vpop.permute.xlu0 %411
    %414 = vset.pattern.permute.xlu0 1
    %415 = vperm.xlu0 %414, %v53
    %v416 = vpop.permute.xlu0 %415
    %418 = vset.pattern.permute.xlu0 1
    %419 = vperm.xlu0 %418, %v54
    %v420 = vpop.permute.xlu0 %419
    %422 = vset.pattern.permute.xlu0 1
    %423 = vperm.xlu0 %422, %v55
    %v424 = vpop.permute.xlu0 %423
    %426 = vset.pattern.permute.xlu0 1
    %427 = vperm.xlu0 %426, %v56
    %v428 = vpop.permute.xlu0 %427
    %430 = vset.pattern.permute.xlu0 1
    %431 = vperm.xlu0 %430, %v57
    %v432 = vpop.permute.xlu0 %431
    %434 = vset.pattern.permute.xlu0 1
    %435 = vperm.xlu0 %434, %v58
    %v436 = vpop.permute.xlu0 %435
    %438 = vset.pattern.permute.xlu0 1
    %439 = vperm.xlu0 %438, %v59
    %v440 = vpop.permute.xlu0 %439
    %442 = vset.pattern.permute.xlu0 1
    %443 = vperm.xlu0 %442, %v60
    %v444 = vpop.permute.xlu0 %443
    %446 = vset.pattern.permute.xlu0 1
    %447 = vperm.xlu0 %446, %v61
    %v448 = vpop.permute.xlu0 %447
    %450 = vset.pattern.permute.xlu0 1
    %451 = vperm.xlu0 %450, %v62
    %v452 = vpop.permute.xlu0 %451
    %454 = vset.pattern.permute.xlu0 1
    %455 = vperm.xlu0 %454, %v63
    %v456 = vpop.permute.xlu0 %455
    %458 = vset.pattern.permute.xlu0 1
    %459 = vperm.xlu0 %458, %v64
    %v460 = vpop.permute.xlu0 %459
    %462 = vset.pattern.permute.xlu0 1
    %463 = vperm.xlu0 %462, %v65
    %v464 = vpop.permute.xlu0 %463
    %v467 = vlaneseq
    %v468 = vshrl.u32 %v467, 7
    %v469 = vsub.s32 0, %v468
    %v470 = vrot.slane %v31, %v469
    %v471 = vlaneseq
    %v472 = vshrl.u32 %v471, 7
    %v473 = vsub.s32 1, %v472
    %v474 = vrot.slane %v31, %v473
    %v475 = vlaneseq
    %v476 = vshrl.u32 %v475, 7
    %v477 = vsub.s32 2, %v476
    %v478 = vrot.slane %v31, %v477
    %v482 = vmul.f32 %v340, %v470
    %v483 = vmul.f32 %v340, %v474
    %v484 = vmul.f32 %v340, %v478
    %v485 = vmul.f32 %v344, %v470
    %v486 = vmul.f32 %v344, %v474
    %v487 = vmul.f32 %v344, %v478
    %v488 = vmul.f32 %v348, %v470
    %v489 = vmul.f32 %v348, %v474
    %v490 = vmul.f32 %v348, %v478
    %v491 = vmul.f32 %v352, %v470
    %v492 = vmul.f32 %v352, %v474
    %v493 = vmul.f32 %v352, %v478
    %v494 = vmul.f32 %v356, %v470
    %v495 = vmul.f32 %v356, %v474
    %v496 = vmul.f32 %v356, %v478
    %v497 = vmul.f32 %v360, %v470
    %v498 = vmul.f32 %v360, %v474
    %v499 = vmul.f32 %v360, %v478
    %v500 = vmul.f32 %v364, %v470
    %v501 = vmul.f32 %v364, %v474
    %v502 = vmul.f32 %v364, %v478
    %v503 = vmul.f32 %v368, %v470
    %v504 = vmul.f32 %v368, %v474
    %v505 = vmul.f32 %v368, %v478
    %v506 = vmul.f32 %v372, %v470
    %v507 = vmul.f32 %v372, %v474
    %v508 = vmul.f32 %v372, %v478
    %v509 = vmul.f32 %v376, %v470
    %v510 = vmul.f32 %v376, %v474
    %v511 = vmul.f32 %v376, %v478
    %v512 = vmul.f32 %v380, %v470
    %v513 = vmul.f32 %v380, %v474
    %v514 = vmul.f32 %v380, %v478
    %v515 = vmul.f32 %v384, %v470
    %v516 = vmul.f32 %v384, %v474
    %v517 = vmul.f32 %v384, %v478
    %v518 = vmul.f32 %v388, %v470
    %v519 = vmul.f32 %v388, %v474
    %v520 = vmul.f32 %v388, %v478
    %v521 = vmul.f32 %v392, %v470
    %v522 = vmul.f32 %v392, %v474
    %v523 = vmul.f32 %v392, %v478
    %v524 = vmul.f32 %v396, %v470
    %v525 = vmul.f32 %v396, %v474
    %v526 = vmul.f32 %v396, %v478
    %v527 = vmul.f32 %v400, %v470
    %v528 = vmul.f32 %v400, %v474
    %v529 = vmul.f32 %v400, %v478
    %v530 = vmul.f32 %v404, %v470
    %v531 = vmul.f32 %v404, %v474
    %v532 = vmul.f32 %v404, %v478
    %v533 = vmul.f32 %v408, %v470
    %v534 = vmul.f32 %v408, %v474
    %v535 = vmul.f32 %v408, %v478
    %v536 = vmul.f32 %v412, %v470
    %v537 = vmul.f32 %v412, %v474
    %v538 = vmul.f32 %v412, %v478
    %v539 = vmul.f32 %v416, %v470
    %v540 = vmul.f32 %v416, %v474
    %v541 = vmul.f32 %v416, %v478
    %v542 = vmul.f32 %v420, %v470
    %v543 = vmul.f32 %v420, %v474
    %v544 = vmul.f32 %v420, %v478
    %v545 = vmul.f32 %v424, %v470
    %v546 = vmul.f32 %v424, %v474
    %v547 = vmul.f32 %v424, %v478
    %v548 = vmul.f32 %v428, %v470
    %v549 = vmul.f32 %v428, %v474
    %v550 = vmul.f32 %v428, %v478
    %v551 = vmul.f32 %v432, %v470
    %v552 = vmul.f32 %v432, %v474
    %v553 = vmul.f32 %v432, %v478
    %v554 = vmul.f32 %v436, %v470
    %v555 = vmul.f32 %v436, %v474
    %v556 = vmul.f32 %v436, %v478
    %v557 = vmul.f32 %v440, %v470
    %v558 = vmul.f32 %v440, %v474
    %v559 = vmul.f32 %v440, %v478
    %v560 = vmul.f32 %v444, %v470
    %v561 = vmul.f32 %v444, %v474
    %v562 = vmul.f32 %v444, %v478
    %v563 = vmul.f32 %v448, %v470
    %v564 = vmul.f32 %v448, %v474
    %v565 = vmul.f32 %v448, %v478
    %v566 = vmul.f32 %v452, %v470
    %v567 = vmul.f32 %v452, %v474
    %v568 = vmul.f32 %v452, %v478
    %v569 = vmul.f32 %v456, %v470
    %v570 = vmul.f32 %v456, %v474
    %v571 = vmul.f32 %v456, %v478
    %v572 = vmul.f32 %v460, %v470
    %v573 = vmul.f32 %v460, %v474
    %v574 = vmul.f32 %v460, %v478
    %v575 = vmul.f32 %v464, %v470
    %v576 = vmul.f32 %v464, %v474
    %v577 = vmul.f32 %v464, %v478
    %v578 = vadd.f32 %v242, %v482
    %v579 = vadd.f32 %v243, %v483
    %v580 = vadd.f32 %v244, %v484
    %v581 = vadd.f32 %v245, %v485
    %v582 = vadd.f32 %v246, %v486
    %v583 = vadd.f32 %v247, %v487
    %v584 = vadd.f32 %v248, %v488
    %v585 = vadd.f32 %v249, %v489
    %v586 = vadd.f32 %v250, %v490
    %v587 = vadd.f32 %v251, %v491
    %v588 = vadd.f32 %v252, %v492
    %v589 = vadd.f32 %v253, %v493
    %v590 = vadd.f32 %v254, %v494
    %v591 = vadd.f32 %v255, %v495
    %v592 = vadd.f32 %v256, %v496
    %v593 = vadd.f32 %v257, %v497
    %v594 = vadd.f32 %v258, %v498
    %v595 = vadd.f32 %v259, %v499
    %v596 = vadd.f32 %v260, %v500
    %v597 = vadd.f32 %v261, %v501
    %v598 = vadd.f32 %v262, %v502
    %v599 = vadd.f32 %v263, %v503
    %v600 = vadd.f32 %v264, %v504
    %v601 = vadd.f32 %v265, %v505
    %v602 = vadd.f32 %v266, %v506
    %v603 = vadd.f32 %v267, %v507
    %v604 = vadd.f32 %v268, %v508
    %v605 = vadd.f32 %v269, %v509
    %v606 = vadd.f32 %v270, %v510
    %v607 = vadd.f32 %v271, %v511
    %v608 = vadd.f32 %v272, %v512
    %v609 = vadd.f32 %v273, %v513
    %v610 = vadd.f32 %v274, %v514
    %v611 = vadd.f32 %v275, %v515
    %v612 = vadd.f32 %v276, %v516
    %v613 = vadd.f32 %v277, %v517
    %v614 = vadd.f32 %v278, %v518
    %v615 = vadd.f32 %v279, %v519
    %v616 = vadd.f32 %v280, %v520
    %v617 = vadd.f32 %v281, %v521
    %v618 = vadd.f32 %v282, %v522
    %v619 = vadd.f32 %v283, %v523
    %v620 = vadd.f32 %v284, %v524
    %v621 = vadd.f32 %v285, %v525
    %v622 = vadd.f32 %v286, %v526
    %v623 = vadd.f32 %v287, %v527
    %v624 = vadd.f32 %v288, %v528
    %v625 = vadd.f32 %v289, %v529
    %v626 = vadd.f32 %v290, %v530
    %v627 = vadd.f32 %v291, %v531
    %v628 = vadd.f32 %v292, %v532
    %v629 = vadd.f32 %v293, %v533
    %v630 = vadd.f32 %v294, %v534
    %v631 = vadd.f32 %v295, %v535
    %v632 = vadd.f32 %v296, %v536
    %v633 = vadd.f32 %v297, %v537
    %v634 = vadd.f32 %v298, %v538
    %v635 = vadd.f32 %v299, %v539
    %v636 = vadd.f32 %v300, %v540
    %v637 = vadd.f32 %v301, %v541
    %v638 = vadd.f32 %v302, %v542
    %v639 = vadd.f32 %v303, %v543
    %v640 = vadd.f32 %v304, %v544
    %v641 = vadd.f32 %v305, %v545
    %v642 = vadd.f32 %v306, %v546
    %v643 = vadd.f32 %v307, %v547
    %v644 = vadd.f32 %v308, %v548
    %v645 = vadd.f32 %v309, %v549
    %v646 = vadd.f32 %v310, %v550
    %v647 = vadd.f32 %v311, %v551
    %v648 = vadd.f32 %v312, %v552
    %v649 = vadd.f32 %v313, %v553
    %v650 = vadd.f32 %v314, %v554
    %v651 = vadd.f32 %v315, %v555
    %v652 = vadd.f32 %v316, %v556
    %v653 = vadd.f32 %v317, %v557
    %v654 = vadd.f32 %v318, %v558
    %v655 = vadd.f32 %v319, %v559
    %v656 = vadd.f32 %v320, %v560
    %v657 = vadd.f32 %v321, %v561
    %v658 = vadd.f32 %v322, %v562
    %v659 = vadd.f32 %v323, %v563
    %v660 = vadd.f32 %v324, %v564
    %v661 = vadd.f32 %v325, %v565
    %v662 = vadd.f32 %v326, %v566
    %v663 = vadd.f32 %v327, %v567
    %v664 = vadd.f32 %v328, %v568
    %v665 = vadd.f32 %v329, %v569
    %v666 = vadd.f32 %v330, %v570
    %v667 = vadd.f32 %v331, %v571
    %v668 = vadd.f32 %v332, %v572
    %v669 = vadd.f32 %v333, %v573
    %v670 = vadd.f32 %v334, %v574
    %v671 = vadd.f32 %v335, %v575
    %v672 = vadd.f32 %v336, %v576
    %v673 = vadd.f32 %v337, %v577
    %674 = vset.pattern.permute.xlu0 2
    %675 = vperm.xlu0 %674, %v34
    %v676 = vpop.permute.xlu0 %675
    %678 = vset.pattern.permute.xlu0 2
    %679 = vperm.xlu0 %678, %v35
    %v680 = vpop.permute.xlu0 %679
    %682 = vset.pattern.permute.xlu0 2
    %683 = vperm.xlu0 %682, %v36
    %v684 = vpop.permute.xlu0 %683
    %686 = vset.pattern.permute.xlu0 2
    %687 = vperm.xlu0 %686, %v37
    %v688 = vpop.permute.xlu0 %687
    %690 = vset.pattern.permute.xlu0 2
    %691 = vperm.xlu0 %690, %v38
    %v692 = vpop.permute.xlu0 %691
    %694 = vset.pattern.permute.xlu0 2
    %695 = vperm.xlu0 %694, %v39
    %v696 = vpop.permute.xlu0 %695
    %698 = vset.pattern.permute.xlu0 2
    %699 = vperm.xlu0 %698, %v40
    %v700 = vpop.permute.xlu0 %699
    %702 = vset.pattern.permute.xlu0 2
    %703 = vperm.xlu0 %702, %v41
    %v704 = vpop.permute.xlu0 %703
    %706 = vset.pattern.permute.xlu0 2
    %707 = vperm.xlu0 %706, %v42
    %v708 = vpop.permute.xlu0 %707
    %710 = vset.pattern.permute.xlu0 2
    %711 = vperm.xlu0 %710, %v43
    %v712 = vpop.permute.xlu0 %711
    %714 = vset.pattern.permute.xlu0 2
    %715 = vperm.xlu0 %714, %v44
    %v716 = vpop.permute.xlu0 %715
    %718 = vset.pattern.permute.xlu0 2
    %719 = vperm.xlu0 %718, %v45
    %v720 = vpop.permute.xlu0 %719
    %722 = vset.pattern.permute.xlu0 2
    %723 = vperm.xlu0 %722, %v46
    %v724 = vpop.permute.xlu0 %723
    %726 = vset.pattern.permute.xlu0 2
    %727 = vperm.xlu0 %726, %v47
    %v728 = vpop.permute.xlu0 %727
    %730 = vset.pattern.permute.xlu0 2
    %731 = vperm.xlu0 %730, %v48
    %v732 = vpop.permute.xlu0 %731
    %734 = vset.pattern.permute.xlu0 2
    %735 = vperm.xlu0 %734, %v49
    %v736 = vpop.permute.xlu0 %735
    %738 = vset.pattern.permute.xlu0 2
    %739 = vperm.xlu0 %738, %v50
    %v740 = vpop.permute.xlu0 %739
    %742 = vset.pattern.permute.xlu0 2
    %743 = vperm.xlu0 %742, %v51
    %v744 = vpop.permute.xlu0 %743
    %746 = vset.pattern.permute.xlu0 2
    %747 = vperm.xlu0 %746, %v52
    %v748 = vpop.permute.xlu0 %747
    %750 = vset.pattern.permute.xlu0 2
    %751 = vperm.xlu0 %750, %v53
    %v752 = vpop.permute.xlu0 %751
    %754 = vset.pattern.permute.xlu0 2
    %755 = vperm.xlu0 %754, %v54
    %v756 = vpop.permute.xlu0 %755
    %758 = vset.pattern.permute.xlu0 2
    %759 = vperm.xlu0 %758, %v55
    %v760 = vpop.permute.xlu0 %759
    %762 = vset.pattern.permute.xlu0 2
    %763 = vperm.xlu0 %762, %v56
    %v764 = vpop.permute.xlu0 %763
    %766 = vset.pattern.permute.xlu0 2
    %767 = vperm.xlu0 %766, %v57
    %v768 = vpop.permute.xlu0 %767
    %770 = vset.pattern.permute.xlu0 2
    %771 = vperm.xlu0 %770, %v58
    %v772 = vpop.permute.xlu0 %771
    %774 = vset.pattern.permute.xlu0 2
    %775 = vperm.xlu0 %774, %v59
    %v776 = vpop.permute.xlu0 %775
    %778 = vset.pattern.permute.xlu0 2
    %779 = vperm.xlu0 %778, %v60
    %v780 = vpop.permute.xlu0 %779
    %782 = vset.pattern.permute.xlu0 2
    %783 = vperm.xlu0 %782, %v61
    %v784 = vpop.permute.xlu0 %783
    %786 = vset.pattern.permute.xlu0 2
    %787 = vperm.xlu0 %786, %v62
    %v788 = vpop.permute.xlu0 %787
    %790 = vset.pattern.permute.xlu0 2
    %791 = vperm.xlu0 %790, %v63
    %v792 = vpop.permute.xlu0 %791
    %794 = vset.pattern.permute.xlu0 2
    %795 = vperm.xlu0 %794, %v64
    %v796 = vpop.permute.xlu0 %795
    %798 = vset.pattern.permute.xlu0 2
    %799 = vperm.xlu0 %798, %v65
    %v800 = vpop.permute.xlu0 %799
    %v803 = vlaneseq
    %v804 = vshrl.u32 %v803, 7
    %v805 = vsub.s32 0, %v804
    %v806 = vrot.slane %v33, %v805
    %v807 = vlaneseq
    %v808 = vshrl.u32 %v807, 7
    %v809 = vsub.s32 1, %v808
    %v810 = vrot.slane %v33, %v809
    %v811 = vlaneseq
    %v812 = vshrl.u32 %v811, 7
    %v813 = vsub.s32 2, %v812
    %v814 = vrot.slane %v33, %v813
    %v818 = vmul.f32 %v676, %v806
    %v819 = vmul.f32 %v676, %v810
    %v820 = vmul.f32 %v676, %v814
    %v821 = vmul.f32 %v680, %v806
    %v822 = vmul.f32 %v680, %v810
    %v823 = vmul.f32 %v680, %v814
    %v824 = vmul.f32 %v684, %v806
    %v825 = vmul.f32 %v684, %v810
    %v826 = vmul.f32 %v684, %v814
    %v827 = vmul.f32 %v688, %v806
    %v828 = vmul.f32 %v688, %v810
    %v829 = vmul.f32 %v688, %v814
    %v830 = vmul.f32 %v692, %v806
    %v831 = vmul.f32 %v692, %v810
    %v832 = vmul.f32 %v692, %v814
    %v833 = vmul.f32 %v696, %v806
    %v834 = vmul.f32 %v696, %v810
    %v835 = vmul.f32 %v696, %v814
    %v836 = vmul.f32 %v700, %v806
    %v837 = vmul.f32 %v700, %v810
    %v838 = vmul.f32 %v700, %v814
    %v839 = vmul.f32 %v704, %v806
    %v840 = vmul.f32 %v704, %v810
    %v841 = vmul.f32 %v704, %v814
    %v842 = vmul.f32 %v708, %v806
    %v843 = vmul.f32 %v708, %v810
    %v844 = vmul.f32 %v708, %v814
    %v845 = vmul.f32 %v712, %v806
    %v846 = vmul.f32 %v712, %v810
    %v847 = vmul.f32 %v712, %v814
    %v848 = vmul.f32 %v716, %v806
    %v849 = vmul.f32 %v716, %v810
    %v850 = vmul.f32 %v716, %v814
    %v851 = vmul.f32 %v720, %v806
    %v852 = vmul.f32 %v720, %v810
    %v853 = vmul.f32 %v720, %v814
    %v854 = vmul.f32 %v724, %v806
    %v855 = vmul.f32 %v724, %v810
    %v856 = vmul.f32 %v724, %v814
    %v857 = vmul.f32 %v728, %v806
    %v858 = vmul.f32 %v728, %v810
    %v859 = vmul.f32 %v728, %v814
    %v860 = vmul.f32 %v732, %v806
    %v861 = vmul.f32 %v732, %v810
    %v862 = vmul.f32 %v732, %v814
    %v863 = vmul.f32 %v736, %v806
    %v864 = vmul.f32 %v736, %v810
    %v865 = vmul.f32 %v736, %v814
    %v866 = vmul.f32 %v740, %v806
    %v867 = vmul.f32 %v740, %v810
    %v868 = vmul.f32 %v740, %v814
    %v869 = vmul.f32 %v744, %v806
    %v870 = vmul.f32 %v744, %v810
    %v871 = vmul.f32 %v744, %v814
    %v872 = vmul.f32 %v748, %v806
    %v873 = vmul.f32 %v748, %v810
    %v874 = vmul.f32 %v748, %v814
    %v875 = vmul.f32 %v752, %v806
    %v876 = vmul.f32 %v752, %v810
    %v877 = vmul.f32 %v752, %v814
    %v878 = vmul.f32 %v756, %v806
    %v879 = vmul.f32 %v756, %v810
    %v880 = vmul.f32 %v756, %v814
    %v881 = vmul.f32 %v760, %v806
    %v882 = vmul.f32 %v760, %v810
    %v883 = vmul.f32 %v760, %v814
    %v884 = vmul.f32 %v764, %v806
    %v885 = vmul.f32 %v764, %v810
    %v886 = vmul.f32 %v764, %v814
    %v887 = vmul.f32 %v768, %v806
    %v888 = vmul.f32 %v768, %v810
    %v889 = vmul.f32 %v768, %v814
    %v890 = vmul.f32 %v772, %v806
    %v891 = vmul.f32 %v772, %v810
    %v892 = vmul.f32 %v772, %v814
    %v893 = vmul.f32 %v776, %v806
    %v894 = vmul.f32 %v776, %v810
    %v895 = vmul.f32 %v776, %v814
    %v896 = vmul.f32 %v780, %v806
    %v897 = vmul.f32 %v780, %v810
    %v898 = vmul.f32 %v780, %v814
    %v899 = vmul.f32 %v784, %v806
    %v900 = vmul.f32 %v784, %v810
    %v901 = vmul.f32 %v784, %v814
    %v902 = vmul.f32 %v788, %v806
    %v903 = vmul.f32 %v788, %v810
    %v904 = vmul.f32 %v788, %v814
    %v905 = vmul.f32 %v792, %v806
    %v906 = vmul.f32 %v792, %v810
    %v907 = vmul.f32 %v792, %v814
    %v908 = vmul.f32 %v796, %v806
    %v909 = vmul.f32 %v796, %v810
    %v910 = vmul.f32 %v796, %v814
    %v911 = vmul.f32 %v800, %v806
    %v912 = vmul.f32 %v800, %v810
    %v913 = vmul.f32 %v800, %v814
    %v914 = vadd.f32 %v578, %v818
    %v915 = vadd.f32 %v579, %v819
    %v916 = vadd.f32 %v580, %v820
    %v917 = vadd.f32 %v581, %v821
    %v918 = vadd.f32 %v582, %v822
    %v919 = vadd.f32 %v583, %v823
    %v920 = vadd.f32 %v584, %v824
    %v921 = vadd.f32 %v585, %v825
    %v922 = vadd.f32 %v586, %v826
    %v923 = vadd.f32 %v587, %v827
    %v924 = vadd.f32 %v588, %v828
    %v925 = vadd.f32 %v589, %v829
    %v926 = vadd.f32 %v590, %v830
    %v927 = vadd.f32 %v591, %v831
    %v928 = vadd.f32 %v592, %v832
    %v929 = vadd.f32 %v593, %v833
    %v930 = vadd.f32 %v594, %v834
    %v931 = vadd.f32 %v595, %v835
    %v932 = vadd.f32 %v596, %v836
    %v933 = vadd.f32 %v597, %v837
    %v934 = vadd.f32 %v598, %v838
    %v935 = vadd.f32 %v599, %v839
    %v936 = vadd.f32 %v600, %v840
    %v937 = vadd.f32 %v601, %v841
    %v938 = vadd.f32 %v602, %v842
    %v939 = vadd.f32 %v603, %v843
    %v940 = vadd.f32 %v604, %v844
    %v941 = vadd.f32 %v605, %v845
    %v942 = vadd.f32 %v606, %v846
    %v943 = vadd.f32 %v607, %v847
    %v944 = vadd.f32 %v608, %v848
    %v945 = vadd.f32 %v609, %v849
    %v946 = vadd.f32 %v610, %v850
    %v947 = vadd.f32 %v611, %v851
    %v948 = vadd.f32 %v612, %v852
    %v949 = vadd.f32 %v613, %v853
    %v950 = vadd.f32 %v614, %v854
    %v951 = vadd.f32 %v615, %v855
    %v952 = vadd.f32 %v616, %v856
    %v953 = vadd.f32 %v617, %v857
    %v954 = vadd.f32 %v618, %v858
    %v955 = vadd.f32 %v619, %v859
    %v956 = vadd.f32 %v620, %v860
    %v957 = vadd.f32 %v621, %v861
    %v958 = vadd.f32 %v622, %v862
    %v959 = vadd.f32 %v623, %v863
    %v960 = vadd.f32 %v624, %v864
    %v961 = vadd.f32 %v625, %v865
    %v962 = vadd.f32 %v626, %v866
    %v963 = vadd.f32 %v627, %v867
    %v964 = vadd.f32 %v628, %v868
    %v965 = vadd.f32 %v629, %v869
    %v966 = vadd.f32 %v630, %v870
    %v967 = vadd.f32 %v631, %v871
    %v968 = vadd.f32 %v632, %v872
    %v969 = vadd.f32 %v633, %v873
    %v970 = vadd.f32 %v634, %v874
    %v971 = vadd.f32 %v635, %v875
    %v972 = vadd.f32 %v636, %v876
    %v973 = vadd.f32 %v637, %v877
    %v974 = vadd.f32 %v638, %v878
    %v975 = vadd.f32 %v639, %v879
    %v976 = vadd.f32 %v640, %v880
    %v977 = vadd.f32 %v641, %v881
    %v978 = vadd.f32 %v642, %v882
    %v979 = vadd.f32 %v643, %v883
    %v980 = vadd.f32 %v644, %v884
    %v981 = vadd.f32 %v645, %v885
    %v982 = vadd.f32 %v646, %v886
    %v983 = vadd.f32 %v647, %v887
    %v984 = vadd.f32 %v648, %v888
    %v985 = vadd.f32 %v649, %v889
    %v986 = vadd.f32 %v650, %v890
    %v987 = vadd.f32 %v651, %v891
    %v988 = vadd.f32 %v652, %v892
    %v989 = vadd.f32 %v653, %v893
    %v990 = vadd.f32 %v654, %v894
    %v991 = vadd.f32 %v655, %v895
    %v992 = vadd.f32 %v656, %v896
    %v993 = vadd.f32 %v657, %v897
    %v994 = vadd.f32 %v658, %v898
    %v995 = vadd.f32 %v659, %v899
    %v996 = vadd.f32 %v660, %v900
    %v997 = vadd.f32 %v661, %v901
    %v998 = vadd.f32 %v662, %v902
    %v999 = vadd.f32 %v663, %v903
    %v1000 = vadd.f32 %v664, %v904
    %v1001 = vadd.f32 %v665, %v905
    %v1002 = vadd.f32 %v666, %v906
    %v1003 = vadd.f32 %v667, %v907
    %v1004 = vadd.f32 %v668, %v908
    %v1005 = vadd.f32 %v669, %v909
    %v1006 = vadd.f32 %v670, %v910
    %v1007 = vadd.f32 %v671, %v911
    %v1008 = vadd.f32 %v672, %v912
    %v1009 = vadd.f32 %v673, %v913
    %v1010 = vld [vmem:[%s2] sm:$0xff]
    %v1011 = vld [vmem:[%s2 + $0x8] sm:$0xff]
    %v1012 = vld [vmem:[%s2 + $0x10] sm:$0xff]
    %v1013 = vld [vmem:[%s2 + $0x18] sm:$0xff]
    %v1014 = vld [vmem:[%s2 + $0x20] sm:$0xff]
    %v1015 = vld [vmem:[%s2 + $0x28] sm:$0xff]
    %v1016 = vld [vmem:[%s2 + $0x30] sm:$0xff]
    %v1017 = vld [vmem:[%s2 + $0x38] sm:$0xff]
    %v1018 = vld [vmem:[%s2 + $0x40] sm:$0xff]
    %v1019 = vld [vmem:[%s2 + $0x48] sm:$0xff]
    %v1020 = vld [vmem:[%s2 + $0x50] sm:$0xff]
    %v1021 = vld [vmem:[%s2 + $0x58] sm:$0xff]
    %v1022 = vld [vmem:[%s2 + $0x60] sm:$0xff]
    %v1023 = vld [vmem:[%s2 + $0x68] sm:$0xff]
    %v1024 = vld [vmem:[%s2 + $0x70] sm:$0xff]
    %v1025 = vld [vmem:[%s2 + $0x78] sm:$0xff]
    %v1026 = vld [vmem:[%s2 + $0x80] sm:$0xff]
    %v1027 = vld [vmem:[%s2 + $0x88] sm:$0xff]
    %v1028 = vld [vmem:[%s2 + $0x90] sm:$0xff]
    %v1029 = vld [vmem:[%s2 + $0x98] sm:$0xff]
    %v1030 = vld [vmem:[%s2 + $0xa0] sm:$0xff]
    %v1031 = vld [vmem:[%s2 + $0xa8] sm:$0xff]
    %v1032 = vld [vmem:[%s2 + $0xb0] sm:$0xff]
    %v1033 = vld [vmem:[%s2 + $0xb8] sm:$0xff]
    %v1034 = vld [vmem:[%s2 + $0xc0] sm:$0xff]
    %v1035 = vld [vmem:[%s2 + $0xc8] sm:$0xff]
    %v1036 = vld [vmem:[%s2 + $0xd0] sm:$0xff]
    %v1037 = vld [vmem:[%s2 + $0xd8] sm:$0xff]
    %v1038 = vld [vmem:[%s2 + $0xe0] sm:$0xff]
    %v1039 = vld [vmem:[%s2 + $0xe8] sm:$0xff]
    %v1040 = vld [vmem:[%s2 + $0xf0] sm:$0xff]
    %v1041 = vld [vmem:[%s2 + $0xf8] sm:$0xff]
    %1043 = vset.pattern.permute.xlu0 0
    %1044 = vperm.xlu0 %1043, %v1010
    %v1045 = vpop.permute.xlu0 %1044
    %1048 = vset.pattern.permute.xlu0 0
    %1049 = vperm.xlu0 %1048, %v1011
    %v1050 = vpop.permute.xlu0 %1049
    %1053 = vset.pattern.permute.xlu0 0
    %1054 = vperm.xlu0 %1053, %v1012
    %v1055 = vpop.permute.xlu0 %1054
    %1058 = vset.pattern.permute.xlu0 0
    %1059 = vperm.xlu0 %1058, %v1013
    %v1060 = vpop.permute.xlu0 %1059
    %1063 = vset.pattern.permute.xlu0 0
    %1064 = vperm.xlu0 %1063, %v1014
    %v1065 = vpop.permute.xlu0 %1064
    %1068 = vset.pattern.permute.xlu0 0
    %1069 = vperm.xlu0 %1068, %v1015
    %v1070 = vpop.permute.xlu0 %1069
    %1073 = vset.pattern.permute.xlu0 0
    %1074 = vperm.xlu0 %1073, %v1016
    %v1075 = vpop.permute.xlu0 %1074
    %1078 = vset.pattern.permute.xlu0 0
    %1079 = vperm.xlu0 %1078, %v1017
    %v1080 = vpop.permute.xlu0 %1079
    %1083 = vset.pattern.permute.xlu0 0
    %1084 = vperm.xlu0 %1083, %v1018
    %v1085 = vpop.permute.xlu0 %1084
    %1088 = vset.pattern.permute.xlu0 0
    %1089 = vperm.xlu0 %1088, %v1019
    %v1090 = vpop.permute.xlu0 %1089
    %1093 = vset.pattern.permute.xlu0 0
    %1094 = vperm.xlu0 %1093, %v1020
    %v1095 = vpop.permute.xlu0 %1094
    %1098 = vset.pattern.permute.xlu0 0
    %1099 = vperm.xlu0 %1098, %v1021
    %v1100 = vpop.permute.xlu0 %1099
    %1103 = vset.pattern.permute.xlu0 0
    %1104 = vperm.xlu0 %1103, %v1022
    %v1105 = vpop.permute.xlu0 %1104
    %1108 = vset.pattern.permute.xlu0 0
    %1109 = vperm.xlu0 %1108, %v1023
    %v1110 = vpop.permute.xlu0 %1109
    %1113 = vset.pattern.permute.xlu0 0
    %1114 = vperm.xlu0 %1113, %v1024
    %v1115 = vpop.permute.xlu0 %1114
    %1118 = vset.pattern.permute.xlu0 0
    %1119 = vperm.xlu0 %1118, %v1025
    %v1120 = vpop.permute.xlu0 %1119
    %1123 = vset.pattern.permute.xlu0 0
    %1124 = vperm.xlu0 %1123, %v1026
    %v1125 = vpop.permute.xlu0 %1124
    %1128 = vset.pattern.permute.xlu0 0
    %1129 = vperm.xlu0 %1128, %v1027
    %v1130 = vpop.permute.xlu0 %1129
    %1133 = vset.pattern.permute.xlu0 0
    %1134 = vperm.xlu0 %1133, %v1028
    %v1135 = vpop.permute.xlu0 %1134
    %1138 = vset.pattern.permute.xlu0 0
    %1139 = vperm.xlu0 %1138, %v1029
    %v1140 = vpop.permute.xlu0 %1139
    %1143 = vset.pattern.permute.xlu0 0
    %1144 = vperm.xlu0 %1143, %v1030
    %v1145 = vpop.permute.xlu0 %1144
    %1148 = vset.pattern.permute.xlu0 0
    %1149 = vperm.xlu0 %1148, %v1031
    %v1150 = vpop.permute.xlu0 %1149
    %1153 = vset.pattern.permute.xlu0 0
    %1154 = vperm.xlu0 %1153, %v1032
    %v1155 = vpop.permute.xlu0 %1154
    %1158 = vset.pattern.permute.xlu0 0
    %1159 = vperm.xlu0 %1158, %v1033
    %v1160 = vpop.permute.xlu0 %1159
    %1163 = vset.pattern.permute.xlu0 0
    %1164 = vperm.xlu0 %1163, %v1034
    %v1165 = vpop.permute.xlu0 %1164
    %1168 = vset.pattern.permute.xlu0 0
    %1169 = vperm.xlu0 %1168, %v1035
    %v1170 = vpop.permute.xlu0 %1169
    %1173 = vset.pattern.permute.xlu0 0
    %1174 = vperm.xlu0 %1173, %v1036
    %v1175 = vpop.permute.xlu0 %1174
    %1178 = vset.pattern.permute.xlu0 0
    %1179 = vperm.xlu0 %1178, %v1037
    %v1180 = vpop.permute.xlu0 %1179
    %1183 = vset.pattern.permute.xlu0 0
    %1184 = vperm.xlu0 %1183, %v1038
    %v1185 = vpop.permute.xlu0 %1184
    %1188 = vset.pattern.permute.xlu0 0
    %1189 = vperm.xlu0 %1188, %v1039
    %v1190 = vpop.permute.xlu0 %1189
    %1193 = vset.pattern.permute.xlu0 0
    %1194 = vperm.xlu0 %1193, %v1040
    %v1195 = vpop.permute.xlu0 %1194
    %1198 = vset.pattern.permute.xlu0 0
    %1199 = vperm.xlu0 %1198, %v1041
    %v1200 = vpop.permute.xlu0 %1199
    %v1202 = vadd.f32 %v914, %v1045
    %v1203 = vadd.f32 %v915, %v1045
    %v1204 = vadd.f32 %v916, %v1045
    %v1205 = vadd.f32 %v917, %v1050
    %v1206 = vadd.f32 %v918, %v1050
    %v1207 = vadd.f32 %v919, %v1050
    %v1208 = vadd.f32 %v920, %v1055
    %v1209 = vadd.f32 %v921, %v1055
    %v1210 = vadd.f32 %v922, %v1055
    %v1211 = vadd.f32 %v923, %v1060
    %v1212 = vadd.f32 %v924, %v1060
    %v1213 = vadd.f32 %v925, %v1060
    %v1214 = vadd.f32 %v926, %v1065
    %v1215 = vadd.f32 %v927, %v1065
    %v1216 = vadd.f32 %v928, %v1065
    %v1217 = vadd.f32 %v929, %v1070
    %v1218 = vadd.f32 %v930, %v1070
    %v1219 = vadd.f32 %v931, %v1070
    %v1220 = vadd.f32 %v932, %v1075
    %v1221 = vadd.f32 %v933, %v1075
    %v1222 = vadd.f32 %v934, %v1075
    %v1223 = vadd.f32 %v935, %v1080
    %v1224 = vadd.f32 %v936, %v1080
    %v1225 = vadd.f32 %v937, %v1080
    %v1226 = vadd.f32 %v938, %v1085
    %v1227 = vadd.f32 %v939, %v1085
    %v1228 = vadd.f32 %v940, %v1085
    %v1229 = vadd.f32 %v941, %v1090
    %v1230 = vadd.f32 %v942, %v1090
    %v1231 = vadd.f32 %v943, %v1090
    %v1232 = vadd.f32 %v944, %v1095
    %v1233 = vadd.f32 %v945, %v1095
    %v1234 = vadd.f32 %v946, %v1095
    %v1235 = vadd.f32 %v947, %v1100
    %v1236 = vadd.f32 %v948, %v1100
    %v1237 = vadd.f32 %v949, %v1100
    %v1238 = vadd.f32 %v950, %v1105
    %v1239 = vadd.f32 %v951, %v1105
    %v1240 = vadd.f32 %v952, %v1105
    %v1241 = vadd.f32 %v953, %v1110
    %v1242 = vadd.f32 %v954, %v1110
    %v1243 = vadd.f32 %v955, %v1110
    %v1244 = vadd.f32 %v956, %v1115
    %v1245 = vadd.f32 %v957, %v1115
    %v1246 = vadd.f32 %v958, %v1115
    %v1247 = vadd.f32 %v959, %v1120
    %v1248 = vadd.f32 %v960, %v1120
    %v1249 = vadd.f32 %v961, %v1120
    %v1250 = vadd.f32 %v962, %v1125
    %v1251 = vadd.f32 %v963, %v1125
    %v1252 = vadd.f32 %v964, %v1125
    %v1253 = vadd.f32 %v965, %v1130
    %v1254 = vadd.f32 %v966, %v1130
    %v1255 = vadd.f32 %v967, %v1130
    %v1256 = vadd.f32 %v968, %v1135
    %v1257 = vadd.f32 %v969, %v1135
    %v1258 = vadd.f32 %v970, %v1135
    %v1259 = vadd.f32 %v971, %v1140
    %v1260 = vadd.f32 %v972, %v1140
    %v1261 = vadd.f32 %v973, %v1140
    %v1262 = vadd.f32 %v974, %v1145
    %v1263 = vadd.f32 %v975, %v1145
    %v1264 = vadd.f32 %v976, %v1145
    %v1265 = vadd.f32 %v977, %v1150
    %v1266 = vadd.f32 %v978, %v1150
    %v1267 = vadd.f32 %v979, %v1150
    %v1268 = vadd.f32 %v980, %v1155
    %v1269 = vadd.f32 %v981, %v1155
    %v1270 = vadd.f32 %v982, %v1155
    %v1271 = vadd.f32 %v983, %v1160
    %v1272 = vadd.f32 %v984, %v1160
    %v1273 = vadd.f32 %v985, %v1160
    %v1274 = vadd.f32 %v986, %v1165
    %v1275 = vadd.f32 %v987, %v1165
    %v1276 = vadd.f32 %v988, %v1165
    %v1277 = vadd.f32 %v989, %v1170
    %v1278 = vadd.f32 %v990, %v1170
    %v1279 = vadd.f32 %v991, %v1170
    %v1280 = vadd.f32 %v992, %v1175
    %v1281 = vadd.f32 %v993, %v1175
    %v1282 = vadd.f32 %v994, %v1175
    %v1283 = vadd.f32 %v995, %v1180
    %v1284 = vadd.f32 %v996, %v1180
    %v1285 = vadd.f32 %v997, %v1180
    %v1286 = vadd.f32 %v998, %v1185
    %v1287 = vadd.f32 %v999, %v1185
    %v1288 = vadd.f32 %v1000, %v1185
    %v1289 = vadd.f32 %v1001, %v1190
    %v1290 = vadd.f32 %v1002, %v1190
    %v1291 = vadd.f32 %v1003, %v1190
    %v1292 = vadd.f32 %v1004, %v1195
    %v1293 = vadd.f32 %v1005, %v1195
    %v1294 = vadd.f32 %v1006, %v1195
    %v1295 = vadd.f32 %v1007, %v1200
    %v1296 = vadd.f32 %v1008, %v1200
    %v1297 = vadd.f32 %v1009, %v1200
    %vm1298 = vcmp.gt.f32.partialorder %v1202, 0.0
    %vm1299 = vcmp.gt.f32.partialorder %v1203, 0.0
    %vm1300 = vcmp.gt.f32.partialorder %v1204, 0.0
    %vm1301 = vcmp.gt.f32.partialorder %v1205, 0.0
    %vm1302 = vcmp.gt.f32.partialorder %v1206, 0.0
    %vm1303 = vcmp.gt.f32.partialorder %v1207, 0.0
    %vm1304 = vcmp.gt.f32.partialorder %v1208, 0.0
    %vm1305 = vcmp.gt.f32.partialorder %v1209, 0.0
    %vm1306 = vcmp.gt.f32.partialorder %v1210, 0.0
    %vm1307 = vcmp.gt.f32.partialorder %v1211, 0.0
    %vm1308 = vcmp.gt.f32.partialorder %v1212, 0.0
    %vm1309 = vcmp.gt.f32.partialorder %v1213, 0.0
    %vm1310 = vcmp.gt.f32.partialorder %v1214, 0.0
    %vm1311 = vcmp.gt.f32.partialorder %v1215, 0.0
    %vm1312 = vcmp.gt.f32.partialorder %v1216, 0.0
    %vm1313 = vcmp.gt.f32.partialorder %v1217, 0.0
    %vm1314 = vcmp.gt.f32.partialorder %v1218, 0.0
    %vm1315 = vcmp.gt.f32.partialorder %v1219, 0.0
    %vm1316 = vcmp.gt.f32.partialorder %v1220, 0.0
    %vm1317 = vcmp.gt.f32.partialorder %v1221, 0.0
    %vm1318 = vcmp.gt.f32.partialorder %v1222, 0.0
    %vm1319 = vcmp.gt.f32.partialorder %v1223, 0.0
    %vm1320 = vcmp.gt.f32.partialorder %v1224, 0.0
    %vm1321 = vcmp.gt.f32.partialorder %v1225, 0.0
    %vm1322 = vcmp.gt.f32.partialorder %v1226, 0.0
    %vm1323 = vcmp.gt.f32.partialorder %v1227, 0.0
    %vm1324 = vcmp.gt.f32.partialorder %v1228, 0.0
    %vm1325 = vcmp.gt.f32.partialorder %v1229, 0.0
    %vm1326 = vcmp.gt.f32.partialorder %v1230, 0.0
    %vm1327 = vcmp.gt.f32.partialorder %v1231, 0.0
    %vm1328 = vcmp.gt.f32.partialorder %v1232, 0.0
    %vm1329 = vcmp.gt.f32.partialorder %v1233, 0.0
    %vm1330 = vcmp.gt.f32.partialorder %v1234, 0.0
    %vm1331 = vcmp.gt.f32.partialorder %v1235, 0.0
    %vm1332 = vcmp.gt.f32.partialorder %v1236, 0.0
    %vm1333 = vcmp.gt.f32.partialorder %v1237, 0.0
    %vm1334 = vcmp.gt.f32.partialorder %v1238, 0.0
    %vm1335 = vcmp.gt.f32.partialorder %v1239, 0.0
    %vm1336 = vcmp.gt.f32.partialorder %v1240, 0.0
    %vm1337 = vcmp.gt.f32.partialorder %v1241, 0.0
    %vm1338 = vcmp.gt.f32.partialorder %v1242, 0.0
    %vm1339 = vcmp.gt.f32.partialorder %v1243, 0.0
    %vm1340 = vcmp.gt.f32.partialorder %v1244, 0.0
    %vm1341 = vcmp.gt.f32.partialorder %v1245, 0.0
    %vm1342 = vcmp.gt.f32.partialorder %v1246, 0.0
    %vm1343 = vcmp.gt.f32.partialorder %v1247, 0.0
    %vm1344 = vcmp.gt.f32.partialorder %v1248, 0.0
    %vm1345 = vcmp.gt.f32.partialorder %v1249, 0.0
    %vm1346 = vcmp.gt.f32.partialorder %v1250, 0.0
    %vm1347 = vcmp.gt.f32.partialorder %v1251, 0.0
    %vm1348 = vcmp.gt.f32.partialorder %v1252, 0.0
    %vm1349 = vcmp.gt.f32.partialorder %v1253, 0.0
    %vm1350 = vcmp.gt.f32.partialorder %v1254, 0.0
    %vm1351 = vcmp.gt.f32.partialorder %v1255, 0.0
    %vm1352 = vcmp.gt.f32.partialorder %v1256, 0.0
    %vm1353 = vcmp.gt.f32.partialorder %v1257, 0.0
    %vm1354 = vcmp.gt.f32.partialorder %v1258, 0.0
    %vm1355 = vcmp.gt.f32.partialorder %v1259, 0.0
    %vm1356 = vcmp.gt.f32.partialorder %v1260, 0.0
    %vm1357 = vcmp.gt.f32.partialorder %v1261, 0.0
    %vm1358 = vcmp.gt.f32.partialorder %v1262, 0.0
    %vm1359 = vcmp.gt.f32.partialorder %v1263, 0.0
    %vm1360 = vcmp.gt.f32.partialorder %v1264, 0.0
    %vm1361 = vcmp.gt.f32.partialorder %v1265, 0.0
    %vm1362 = vcmp.gt.f32.partialorder %v1266, 0.0
    %vm1363 = vcmp.gt.f32.partialorder %v1267, 0.0
    %vm1364 = vcmp.gt.f32.partialorder %v1268, 0.0
    %vm1365 = vcmp.gt.f32.partialorder %v1269, 0.0
    %vm1366 = vcmp.gt.f32.partialorder %v1270, 0.0
    %vm1367 = vcmp.gt.f32.partialorder %v1271, 0.0
    %vm1368 = vcmp.gt.f32.partialorder %v1272, 0.0
    %vm1369 = vcmp.gt.f32.partialorder %v1273, 0.0
    %vm1370 = vcmp.gt.f32.partialorder %v1274, 0.0
    %vm1371 = vcmp.gt.f32.partialorder %v1275, 0.0
    %vm1372 = vcmp.gt.f32.partialorder %v1276, 0.0
    %vm1373 = vcmp.gt.f32.partialorder %v1277, 0.0
    %vm1374 = vcmp.gt.f32.partialorder %v1278, 0.0
    %vm1375 = vcmp.gt.f32.partialorder %v1279, 0.0
    %vm1376 = vcmp.gt.f32.partialorder %v1280, 0.0
    %vm1377 = vcmp.gt.f32.partialorder %v1281, 0.0
    %vm1378 = vcmp.gt.f32.partialorder %v1282, 0.0
    %vm1379 = vcmp.gt.f32.partialorder %v1283, 0.0
    %vm1380 = vcmp.gt.f32.partialorder %v1284, 0.0
    %vm1381 = vcmp.gt.f32.partialorder %v1285, 0.0
    %vm1382 = vcmp.gt.f32.partialorder %v1286, 0.0
    %vm1383 = vcmp.gt.f32.partialorder %v1287, 0.0
    %vm1384 = vcmp.gt.f32.partialorder %v1288, 0.0
    %vm1385 = vcmp.gt.f32.partialorder %v1289, 0.0
    %vm1386 = vcmp.gt.f32.partialorder %v1290, 0.0
    %vm1387 = vcmp.gt.f32.partialorder %v1291, 0.0
    %vm1388 = vcmp.gt.f32.partialorder %v1292, 0.0
    %vm1389 = vcmp.gt.f32.partialorder %v1293, 0.0
    %vm1390 = vcmp.gt.f32.partialorder %v1294, 0.0
    %vm1391 = vcmp.gt.f32.partialorder %v1295, 0.0
    %vm1392 = vcmp.gt.f32.partialorder %v1296, 0.0
    %vm1393 = vcmp.gt.f32.partialorder %v1297, 0.0
    %v1394 = vmul.f32 %v1202, 0.2
    %v1395 = vmul.f32 %v1203, 0.2
    %v1396 = vmul.f32 %v1204, 0.2
    %v1397 = vmul.f32 %v1205, 0.2
    %v1398 = vmul.f32 %v1206, 0.2
    %v1399 = vmul.f32 %v1207, 0.2
    %v1400 = vmul.f32 %v1208, 0.2
    %v1401 = vmul.f32 %v1209, 0.2
    %v1402 = vmul.f32 %v1210, 0.2
    %v1403 = vmul.f32 %v1211, 0.2
    %v1404 = vmul.f32 %v1212, 0.2
    %v1405 = vmul.f32 %v1213, 0.2
    %v1406 = vmul.f32 %v1214, 0.2
    %v1407 = vmul.f32 %v1215, 0.2
    %v1408 = vmul.f32 %v1216, 0.2
    %v1409 = vmul.f32 %v1217, 0.2
    %v1410 = vmul.f32 %v1218, 0.2
    %v1411 = vmul.f32 %v1219, 0.2
    %v1412 = vmul.f32 %v1220, 0.2
    %v1413 = vmul.f32 %v1221, 0.2
    %v1414 = vmul.f32 %v1222, 0.2
    %v1415 = vmul.f32 %v1223, 0.2
    %v1416 = vmul.f32 %v1224, 0.2
    %v1417 = vmul.f32 %v1225, 0.2
    %v1418 = vmul.f32 %v1226, 0.2
    %v1419 = vmul.f32 %v1227, 0.2
    %v1420 = vmul.f32 %v1228, 0.2
    %v1421 = vmul.f32 %v1229, 0.2
    %v1422 = vmul.f32 %v1230, 0.2
    %v1423 = vmul.f32 %v1231, 0.2
    %v1424 = vmul.f32 %v1232, 0.2
    %v1425 = vmul.f32 %v1233, 0.2
    %v1426 = vmul.f32 %v1234, 0.2
    %v1427 = vmul.f32 %v1235, 0.2
    %v1428 = vmul.f32 %v1236, 0.2
    %v1429 = vmul.f32 %v1237, 0.2
    %v1430 = vmul.f32 %v1238, 0.2
    %v1431 = vmul.f32 %v1239, 0.2
    %v1432 = vmul.f32 %v1240, 0.2
    %v1433 = vmul.f32 %v1241, 0.2
    %v1434 = vmul.f32 %v1242, 0.2
    %v1435 = vmul.f32 %v1243, 0.2
    %v1436 = vmul.f32 %v1244, 0.2
    %v1437 = vmul.f32 %v1245, 0.2
    %v1438 = vmul.f32 %v1246, 0.2
    %v1439 = vmul.f32 %v1247, 0.2
    %v1440 = vmul.f32 %v1248, 0.2
    %v1441 = vmul.f32 %v1249, 0.2
    %v1442 = vmul.f32 %v1250, 0.2
    %v1443 = vmul.f32 %v1251, 0.2
    %v1444 = vmul.f32 %v1252, 0.2
    %v1445 = vmul.f32 %v1253, 0.2
    %v1446 = vmul.f32 %v1254, 0.2
    %v1447 = vmul.f32 %v1255, 0.2
    %v1448 = vmul.f32 %v1256, 0.2
    %v1449 = vmul.f32 %v1257, 0.2
    %v1450 = vmul.f32 %v1258, 0.2
    %v1451 = vmul.f32 %v1259, 0.2
    %v1452 = vmul.f32 %v1260, 0.2
    %v1453 = vmul.f32 %v1261, 0.2
    %v1454 = vmul.f32 %v1262, 0.2
    %v1455 = vmul.f32 %v1263, 0.2
    %v1456 = vmul.f32 %v1264, 0.2
    %v1457 = vmul.f32 %v1265, 0.2
    %v1458 = vmul.f32 %v1266, 0.2
    %v1459 = vmul.f32 %v1267, 0.2
    %v1460 = vmul.f32 %v1268, 0.2
    %v1461 = vmul.f32 %v1269, 0.2
    %v1462 = vmul.f32 %v1270, 0.2
    %v1463 = vmul.f32 %v1271, 0.2
    %v1464 = vmul.f32 %v1272, 0.2
    %v1465 = vmul.f32 %v1273, 0.2
    %v1466 = vmul.f32 %v1274, 0.2
    %v1467 = vmul.f32 %v1275, 0.2
    %v1468 = vmul.f32 %v1276, 0.2
    %v1469 = vmul.f32 %v1277, 0.2
    %v1470 = vmul.f32 %v1278, 0.2
    %v1471 = vmul.f32 %v1279, 0.2
    %v1472 = vmul.f32 %v1280, 0.2
    %v1473 = vmul.f32 %v1281, 0.2
    %v1474 = vmul.f32 %v1282, 0.2
    %v1475 = vmul.f32 %v1283, 0.2
    %v1476 = vmul.f32 %v1284, 0.2
    %v1477 = vmul.f32 %v1285, 0.2
    %v1478 = vmul.f32 %v1286, 0.2
    %v1479 = vmul.f32 %v1287, 0.2
    %v1480 = vmul.f32 %v1288, 0.2
    %v1481 = vmul.f32 %v1289, 0.2
    %v1482 = vmul.f32 %v1290, 0.2
    %v1483 = vmul.f32 %v1291, 0.2
    %v1484 = vmul.f32 %v1292, 0.2
    %v1485 = vmul.f32 %v1293, 0.2
    %v1486 = vmul.f32 %v1294, 0.2
    %v1487 = vmul.f32 %v1295, 0.2
    %v1488 = vmul.f32 %v1296, 0.2
    %v1489 = vmul.f32 %v1297, 0.2
    %v1490 = vsel %vm1298, %v1202, %v1394
    %v1491 = vsel %vm1299, %v1203, %v1395
    %v1492 = vsel %vm1300, %v1204, %v1396
    %v1493 = vsel %vm1301, %v1205, %v1397
    %v1494 = vsel %vm1302, %v1206, %v1398
    %v1495 = vsel %vm1303, %v1207, %v1399
    %v1496 = vsel %vm1304, %v1208, %v1400
    %v1497 = vsel %vm1305, %v1209, %v1401
    %v1498 = vsel %vm1306, %v1210, %v1402
    %v1499 = vsel %vm1307, %v1211, %v1403
    %v1500 = vsel %vm1308, %v1212, %v1404
    %v1501 = vsel %vm1309, %v1213, %v1405
    %v1502 = vsel %vm1310, %v1214, %v1406
    %v1503 = vsel %vm1311, %v1215, %v1407
    %v1504 = vsel %vm1312, %v1216, %v1408
    %v1505 = vsel %vm1313, %v1217, %v1409
    %v1506 = vsel %vm1314, %v1218, %v1410
    %v1507 = vsel %vm1315, %v1219, %v1411
    %v1508 = vsel %vm1316, %v1220, %v1412
    %v1509 = vsel %vm1317, %v1221, %v1413
    %v1510 = vsel %vm1318, %v1222, %v1414
    %v1511 = vsel %vm1319, %v1223, %v1415
    %v1512 = vsel %vm1320, %v1224, %v1416
    %v1513 = vsel %vm1321, %v1225, %v1417
    %v1514 = vsel %vm1322, %v1226, %v1418
    %v1515 = vsel %vm1323, %v1227, %v1419
    %v1516 = vsel %vm1324, %v1228, %v1420
    %v1517 = vsel %vm1325, %v1229, %v1421
    %v1518 = vsel %vm1326, %v1230, %v1422
    %v1519 = vsel %vm1327, %v1231, %v1423
    %v1520 = vsel %vm1328, %v1232, %v1424
    %v1521 = vsel %vm1329, %v1233, %v1425
    %v1522 = vsel %vm1330, %v1234, %v1426
    %v1523 = vsel %vm1331, %v1235, %v1427
    %v1524 = vsel %vm1332, %v1236, %v1428
    %v1525 = vsel %vm1333, %v1237, %v1429
    %v1526 = vsel %vm1334, %v1238, %v1430
    %v1527 = vsel %vm1335, %v1239, %v1431
    %v1528 = vsel %vm1336, %v1240, %v1432
    %v1529 = vsel %vm1337, %v1241, %v1433
    %v1530 = vsel %vm1338, %v1242, %v1434
    %v1531 = vsel %vm1339, %v1243, %v1435
    %v1532 = vsel %vm1340, %v1244, %v1436
    %v1533 = vsel %vm1341, %v1245, %v1437
    %v1534 = vsel %vm1342, %v1246, %v1438
    %v1535 = vsel %vm1343, %v1247, %v1439
    %v1536 = vsel %vm1344, %v1248, %v1440
    %v1537 = vsel %vm1345, %v1249, %v1441
    %v1538 = vsel %vm1346, %v1250, %v1442
    %v1539 = vsel %vm1347, %v1251, %v1443
    %v1540 = vsel %vm1348, %v1252, %v1444
    %v1541 = vsel %vm1349, %v1253, %v1445
    %v1542 = vsel %vm1350, %v1254, %v1446
    %v1543 = vsel %vm1351, %v1255, %v1447
    %v1544 = vsel %vm1352, %v1256, %v1448
    %v1545 = vsel %vm1353, %v1257, %v1449
    %v1546 = vsel %vm1354, %v1258, %v1450
    %v1547 = vsel %vm1355, %v1259, %v1451
    %v1548 = vsel %vm1356, %v1260, %v1452
    %v1549 = vsel %vm1357, %v1261, %v1453
    %v1550 = vsel %vm1358, %v1262, %v1454
    %v1551 = vsel %vm1359, %v1263, %v1455
    %v1552 = vsel %vm1360, %v1264, %v1456
    %v1553 = vsel %vm1361, %v1265, %v1457
    %v1554 = vsel %vm1362, %v1266, %v1458
    %v1555 = vsel %vm1363, %v1267, %v1459
    %v1556 = vsel %vm1364, %v1268, %v1460
    %v1557 = vsel %vm1365, %v1269, %v1461
    %v1558 = vsel %vm1366, %v1270, %v1462
    %v1559 = vsel %vm1367, %v1271, %v1463
    %v1560 = vsel %vm1368, %v1272, %v1464
    %v1561 = vsel %vm1369, %v1273, %v1465
    %v1562 = vsel %vm1370, %v1274, %v1466
    %v1563 = vsel %vm1371, %v1275, %v1467
    %v1564 = vsel %vm1372, %v1276, %v1468
    %v1565 = vsel %vm1373, %v1277, %v1469
    %v1566 = vsel %vm1374, %v1278, %v1470
    %v1567 = vsel %vm1375, %v1279, %v1471
    %v1568 = vsel %vm1376, %v1280, %v1472
    %v1569 = vsel %vm1377, %v1281, %v1473
    %v1570 = vsel %vm1378, %v1282, %v1474
    %v1571 = vsel %vm1379, %v1283, %v1475
    %v1572 = vsel %vm1380, %v1284, %v1476
    %v1573 = vsel %vm1381, %v1285, %v1477
    %v1574 = vsel %vm1382, %v1286, %v1478
    %v1575 = vsel %vm1383, %v1287, %v1479
    %v1576 = vsel %vm1384, %v1288, %v1480
    %v1577 = vsel %vm1385, %v1289, %v1481
    %v1578 = vsel %vm1386, %v1290, %v1482
    %v1579 = vsel %vm1387, %v1291, %v1483
    %v1580 = vsel %vm1388, %v1292, %v1484
    %v1581 = vsel %vm1389, %v1293, %v1485
    %v1582 = vsel %vm1390, %v1294, %v1486
    %v1583 = vsel %vm1391, %v1295, %v1487
    %v1584 = vsel %vm1392, %v1296, %v1488
    %v1585 = vsel %vm1393, %v1297, %v1489
    %v1586 = vld [vmem:[%s3] sm:$0xff]
    %v1587 = vld [vmem:[%s3 + $0x8] sm:$0xff]
    %v1588 = vld [vmem:[%s3 + $0x10] sm:$0xff]
    %v1589 = vld [vmem:[%s3 + $0x18] sm:$0xff]
    %v1590 = vld [vmem:[%s3 + $0x20] sm:$0xff]
    %v1591 = vld [vmem:[%s3 + $0x28] sm:$0xff]
    %v1592 = vld [vmem:[%s3 + $0x30] sm:$0xff]
    %v1593 = vld [vmem:[%s3 + $0x38] sm:$0xff]
    %v1594 = vld [vmem:[%s3 + $0x40] sm:$0xff]
    %v1595 = vld [vmem:[%s3 + $0x48] sm:$0xff]
    %v1596 = vld [vmem:[%s3 + $0x50] sm:$0xff]
    %v1597 = vld [vmem:[%s3 + $0x58] sm:$0xff]
    %v1598 = vld [vmem:[%s3 + $0x60] sm:$0xff]
    %v1599 = vld [vmem:[%s3 + $0x68] sm:$0xff]
    %v1600 = vld [vmem:[%s3 + $0x70] sm:$0xff]
    %v1601 = vld [vmem:[%s3 + $0x78] sm:$0xff]
    %v1602 = vpack.c.bf16 %v1493, %v1490
    %v1603 = vpack.c.bf16 %v1494, %v1491
    %v1604 = vpack.c.bf16 %v1495, %v1492
    %v1605 = vpack.c.bf16 %v1499, %v1496
    %v1606 = vpack.c.bf16 %v1500, %v1497
    %v1607 = vpack.c.bf16 %v1501, %v1498
    %v1608 = vpack.c.bf16 %v1505, %v1502
    %v1609 = vpack.c.bf16 %v1506, %v1503
    %v1610 = vpack.c.bf16 %v1507, %v1504
    %v1611 = vpack.c.bf16 %v1511, %v1508
    %v1612 = vpack.c.bf16 %v1512, %v1509
    %v1613 = vpack.c.bf16 %v1513, %v1510
    %v1614 = vpack.c.bf16 %v1517, %v1514
    %v1615 = vpack.c.bf16 %v1518, %v1515
    %v1616 = vpack.c.bf16 %v1519, %v1516
    %v1617 = vpack.c.bf16 %v1523, %v1520
    %v1618 = vpack.c.bf16 %v1524, %v1521
    %v1619 = vpack.c.bf16 %v1525, %v1522
    %v1620 = vpack.c.bf16 %v1529, %v1526
    %v1621 = vpack.c.bf16 %v1530, %v1527
    %v1622 = vpack.c.bf16 %v1531, %v1528
    %v1623 = vpack.c.bf16 %v1535, %v1532
    %v1624 = vpack.c.bf16 %v1536, %v1533
    %v1625 = vpack.c.bf16 %v1537, %v1534
    %v1626 = vpack.c.bf16 %v1541, %v1538
    %v1627 = vpack.c.bf16 %v1542, %v1539
    %v1628 = vpack.c.bf16 %v1543, %v1540
    %v1629 = vpack.c.bf16 %v1547, %v1544
    %v1630 = vpack.c.bf16 %v1548, %v1545
    %v1631 = vpack.c.bf16 %v1549, %v1546
    %v1632 = vpack.c.bf16 %v1553, %v1550
    %v1633 = vpack.c.bf16 %v1554, %v1551
    %v1634 = vpack.c.bf16 %v1555, %v1552
    %v1635 = vpack.c.bf16 %v1559, %v1556
    %v1636 = vpack.c.bf16 %v1560, %v1557
    %v1637 = vpack.c.bf16 %v1561, %v1558
    %v1638 = vpack.c.bf16 %v1565, %v1562
    %v1639 = vpack.c.bf16 %v1566, %v1563
    %v1640 = vpack.c.bf16 %v1567, %v1564
    %v1641 = vpack.c.bf16 %v1571, %v1568
    %v1642 = vpack.c.bf16 %v1572, %v1569
    %v1643 = vpack.c.bf16 %v1573, %v1570
    %v1644 = vpack.c.bf16 %v1577, %v1574
    %v1645 = vpack.c.bf16 %v1578, %v1575
    %v1646 = vpack.c.bf16 %v1579, %v1576
    %v1647 = vpack.c.bf16 %v1583, %v1580
    %v1648 = vpack.c.bf16 %v1584, %v1581
    %v1649 = vpack.c.bf16 %v1585, %v1582
    %v1650 = vld [vmem:[%s4] sm:$0xff]
    %v1651 = vld [vmem:[%s4 + $0x8] sm:$0xff]
    %v1652 = vld [vmem:[%s4 + $0x10] sm:$0xff]
    %v1653 = vld [vmem:[%s4 + $0x18] sm:$0xff]
    %v1654 = vld [vmem:[%s4 + $0x20] sm:$0xff]
    %v1655 = vld [vmem:[%s4 + $0x28] sm:$0xff]
    %v1656 = vld [vmem:[%s4 + $0x30] sm:$0xff]
    %v1657 = vld [vmem:[%s4 + $0x38] sm:$0xff]
    %v1658 = vld [vmem:[%s4 + $0x40] sm:$0xff]
    %v1659 = vld [vmem:[%s4 + $0x48] sm:$0xff]
    %v1660 = vld [vmem:[%s4 + $0x50] sm:$0xff]
    %v1661 = vld [vmem:[%s4 + $0x58] sm:$0xff]
    %v1662 = vld [vmem:[%s4 + $0x60] sm:$0xff]
    %v1663 = vld [vmem:[%s4 + $0x68] sm:$0xff]
    %v1664 = vld [vmem:[%s4 + $0x70] sm:$0xff]
    %v1665 = vld [vmem:[%s4 + $0x78] sm:$0xff]
    %1667 = vset.pattern.permute.xlu0 0
    %1668 = vperm.xlu0 %1667, %v1650
    %v1669 = vpop.permute.xlu0 %1668
    %1672 = vset.pattern.permute.xlu0 0
    %1673 = vperm.xlu0 %1672, %v1651
    %v1674 = vpop.permute.xlu0 %1673
    %1677 = vset.pattern.permute.xlu0 0
    %1678 = vperm.xlu0 %1677, %v1652
    %v1679 = vpop.permute.xlu0 %1678
    %1682 = vset.pattern.permute.xlu0 0
    %1683 = vperm.xlu0 %1682, %v1653
    %v1684 = vpop.permute.xlu0 %1683
    %1687 = vset.pattern.permute.xlu0 0
    %1688 = vperm.xlu0 %1687, %v1654
    %v1689 = vpop.permute.xlu0 %1688
    %1692 = vset.pattern.permute.xlu0 0
    %1693 = vperm.xlu0 %1692, %v1655
    %v1694 = vpop.permute.xlu0 %1693
    %1697 = vset.pattern.permute.xlu0 0
    %1698 = vperm.xlu0 %1697, %v1656
    %v1699 = vpop.permute.xlu0 %1698
    %1702 = vset.pattern.permute.xlu0 0
    %1703 = vperm.xlu0 %1702, %v1657
    %v1704 = vpop.permute.xlu0 %1703
    %1707 = vset.pattern.permute.xlu0 0
    %1708 = vperm.xlu0 %1707, %v1658
    %v1709 = vpop.permute.xlu0 %1708
    %1712 = vset.pattern.permute.xlu0 0
    %1713 = vperm.xlu0 %1712, %v1659
    %v1714 = vpop.permute.xlu0 %1713
    %1717 = vset.pattern.permute.xlu0 0
    %1718 = vperm.xlu0 %1717, %v1660
    %v1719 = vpop.permute.xlu0 %1718
    %1722 = vset.pattern.permute.xlu0 0
    %1723 = vperm.xlu0 %1722, %v1661
    %v1724 = vpop.permute.xlu0 %1723
    %1727 = vset.pattern.permute.xlu0 0
    %1728 = vperm.xlu0 %1727, %v1662
    %v1729 = vpop.permute.xlu0 %1728
    %1732 = vset.pattern.permute.xlu0 0
    %1733 = vperm.xlu0 %1732, %v1663
    %v1734 = vpop.permute.xlu0 %1733
    %1737 = vset.pattern.permute.xlu0 0
    %1738 = vperm.xlu0 %1737, %v1664
    %v1739 = vpop.permute.xlu0 %1738
    %1742 = vset.pattern.permute.xlu0 0
    %1743 = vperm.xlu0 %1742, %v1665
    %v1744 = vpop.permute.xlu0 %1743
    %v1762 = vunpack.c.l.b16 %v1586
    %v1763 = vunpack.c.h.b16 %v1586
    %v1764 = vunpack.c.l.b16 %v1587
    %v1765 = vunpack.c.h.b16 %v1587
    %v1766 = vunpack.c.l.b16 %v1588
    %v1767 = vunpack.c.h.b16 %v1588
    %v1768 = vunpack.c.l.b16 %v1589
    %v1769 = vunpack.c.h.b16 %v1589
    %v1770 = vunpack.c.l.b16 %v1590
    %v1771 = vunpack.c.h.b16 %v1590
    %v1772 = vunpack.c.l.b16 %v1591
    %v1773 = vunpack.c.h.b16 %v1591
    %v1774 = vunpack.c.l.b16 %v1592
    %v1775 = vunpack.c.h.b16 %v1592
    %v1776 = vunpack.c.l.b16 %v1593
    %v1777 = vunpack.c.h.b16 %v1593
    %v1778 = vunpack.c.l.b16 %v1594
    %v1779 = vunpack.c.h.b16 %v1594
    %v1780 = vunpack.c.l.b16 %v1595
    %v1781 = vunpack.c.h.b16 %v1595
    %v1782 = vunpack.c.l.b16 %v1596
    %v1783 = vunpack.c.h.b16 %v1596
    %v1784 = vunpack.c.l.b16 %v1597
    %v1785 = vunpack.c.h.b16 %v1597
    %v1786 = vunpack.c.l.b16 %v1598
    %v1787 = vunpack.c.h.b16 %v1598
    %v1788 = vunpack.c.l.b16 %v1599
    %v1789 = vunpack.c.h.b16 %v1599
    %v1790 = vunpack.c.l.b16 %v1600
    %v1791 = vunpack.c.h.b16 %v1600
    %v1792 = vunpack.c.l.b16 %v1601
    %v1793 = vunpack.c.h.b16 %v1601
    %v1794 = vpack.c.b16 %v1764, %v1762
    %v1795 = vpack.c.b16 %v1765, %v1763
    %v1796 = vpack.c.b16 %v1768, %v1766
    %v1797 = vpack.c.b16 %v1769, %v1767
    %v1798 = vpack.c.b16 %v1772, %v1770
    %v1799 = vpack.c.b16 %v1773, %v1771
    %v1800 = vpack.c.b16 %v1776, %v1774
    %v1801 = vpack.c.b16 %v1777, %v1775
    %v1802 = vpack.c.b16 %v1780, %v1778
    %v1803 = vpack.c.b16 %v1781, %v1779
    %v1804 = vpack.c.b16 %v1784, %v1782
    %v1805 = vpack.c.b16 %v1785, %v1783
    %v1806 = vpack.c.b16 %v1788, %v1786
    %v1807 = vpack.c.b16 %v1789, %v1787
    %v1808 = vpack.c.b16 %v1792, %v1790
    %v1809 = vpack.c.b16 %v1793, %v1791
    %1826 = vmatprep.subr.bf16.mxu0 %v1603
    %1827 = vmatpush1.bf16.msra.mxu0 %v1602
    %1828 = vmatprep.subr.bf16.mxu0 %v1606
    %1829 = vmatpush1.bf16.msra.mxu0 %v1605
    %1830 = vmatprep.subr.bf16.mxu0 %v1609
    %1831 = vmatpush1.bf16.msra.mxu0 %v1608
    %1832 = vmatprep.subr.bf16.mxu0 %v1612
    %1833 = vmatpush1.bf16.msra.mxu0 %v1611
    %1834 = vmatprep.subr.bf16.mxu0 %v1615
    %1835 = vmatpush1.bf16.msra.mxu0 %v1614
    %1836 = vmatprep.subr.bf16.mxu0 %v1618
    %1837 = vmatpush1.bf16.msra.mxu0 %v1617
    %1838 = vmatprep.subr.bf16.mxu0 %v1621
    %1839 = vmatpush1.bf16.msra.mxu0 %v1620
    %1840 = vmatprep.subr.bf16.mxu0 %v1624
    %1841 = vmatpush1.bf16.msra.mxu0 %v1623
    %1842 = vmatprep.subr.bf16.mxu0 %v1627
    %1843 = vmatpush1.bf16.msra.mxu0 %v1626
    %1844 = vmatprep.subr.bf16.mxu0 %v1630
    %1845 = vmatpush1.bf16.msra.mxu0 %v1629
    %1846 = vmatprep.subr.bf16.mxu0 %v1633
    %1847 = vmatpush1.bf16.msra.mxu0 %v1632
    %1848 = vmatprep.subr.bf16.mxu0 %v1636
    %1849 = vmatpush1.bf16.msra.mxu0 %v1635
    %1850 = vmatprep.subr.bf16.mxu0 %v1639
    %1851 = vmatpush1.bf16.msra.mxu0 %v1638
    %1852 = vmatprep.subr.bf16.mxu0 %v1642
    %1853 = vmatpush1.bf16.msra.mxu0 %v1641
    %1854 = vmatprep.subr.bf16.mxu0 %v1645
    %1855 = vmatpush1.bf16.msra.mxu0 %v1644
    %1856 = vmatprep.subr.bf16.mxu0 %v1648
    %1857 = vmatpush1.bf16.msra.mxu0 %v1647
    %1858 = vmatprep.mubr.bf16.mxu0 %v1795
    %1859 = vmatmul.mubr.bf16.gmra.mrb[0].mxu0 %v1794
    %v1860 = vpop.f32.mrb[0].mxu0
    %v1861 = vadd.f32 %v1669, %v1860
    %v1862 = vpop.f32.mrb[0].mxu0
    %v1863 = vadd.f32 %v1669, %v1862
    %v1864 = vpop.f32.mrb[0].mxu0
    %v1865 = vadd.f32 %v1674, %v1864
    %v1866 = vpop.f32.mrb[0].mxu0
    %v1867 = vadd.f32 %v1674, %v1866
    %1868 = vmatprep.mubr.bf16.mxu0 %v1797
    %1869 = vmatmul.mubr.bf16.gmra.mrb[0].mxu0 %v1796
    %v1870 = vpop.f32.mrb[0].mxu0
    %v1871 = vadd.f32 %v1679, %v1870
    %v1872 = vpop.f32.mrb[0].mxu0
    %v1873 = vadd.f32 %v1679, %v1872
    %v1874 = vpop.f32.mrb[0].mxu0
    %v1875 = vadd.f32 %v1684, %v1874
    %v1876 = vpop.f32.mrb[0].mxu0
    %v1877 = vadd.f32 %v1684, %v1876
    %1878 = vmatprep.mubr.bf16.mxu0 %v1799
    %1879 = vmatmul.mubr.bf16.gmra.mrb[0].mxu0 %v1798
    %v1880 = vpop.f32.mrb[0].mxu0
    %v1881 = vadd.f32 %v1689, %v1880
    %v1882 = vpop.f32.mrb[0].mxu0
    %v1883 = vadd.f32 %v1689, %v1882
    %v1884 = vpop.f32.mrb[0].mxu0
    %v1885 = vadd.f32 %v1694, %v1884
    %v1886 = vpop.f32.mrb[0].mxu0
    %v1887 = vadd.f32 %v1694, %v1886
    %1888 = vmatprep.mubr.bf16.mxu0 %v1801
    %1889 = vmatmul.mubr.bf16.gmra.mrb[0].mxu0 %v1800
    %v1890 = vpop.f32.mrb[0].mxu0
    %v1891 = vadd.f32 %v1699, %v1890
    %v1892 = vpop.f32.mrb[0].mxu0
    %v1893 = vadd.f32 %v1699, %v1892
    %v1894 = vpop.f32.mrb[0].mxu0
    %v1895 = vadd.f32 %v1704, %v1894
    %v1896 = vpop.f32.mrb[0].mxu0
    %v1897 = vadd.f32 %v1704, %v1896
    %1898 = vmatprep.mubr.bf16.mxu0 %v1803
    %1899 = vmatmul.mubr.bf16.gmra.mrb[0].mxu0 %v1802
    %v1900 = vpop.f32.mrb[0].mxu0
    %v1901 = vadd.f32 %v1709, %v1900
    %v1902 = vpop.f32.mrb[0].mxu0
    %v1903 = vadd.f32 %v1709, %v1902
    %v1904 = vpop.f32.mrb[0].mxu0
    %v1905 = vadd.f32 %v1714, %v1904
    %v1906 = vpop.f32.mrb[0].mxu0
    %v1907 = vadd.f32 %v1714, %v1906
    %1908 = vmatprep.mubr.bf16.mxu0 %v1805
    %1909 = vmatmul.mubr.bf16.gmra.mrb[0].mxu0 %v1804
    %v1910 = vpop.f32.mrb[0].mxu0
    %v1911 = vadd.f32 %v1719, %v1910
    %v1912 = vpop.f32.mrb[0].mxu0
    %v1913 = vadd.f32 %v1719, %v1912
    %v1914 = vpop.f32.mrb[0].mxu0
    %v1915 = vadd.f32 %v1724, %v1914
    %v1916 = vpop.f32.mrb[0].mxu0
    %v1917 = vadd.f32 %v1724, %v1916
    %1918 = vmatprep.mubr.bf16.mxu0 %v1807
    %1919 = vmatmul.mubr.bf16.gmra.mrb[0].mxu0 %v1806
    %v1920 = vpop.f32.mrb[0].mxu0
    %v1921 = vadd.f32 %v1729, %v1920
    %v1922 = vpop.f32.mrb[0].mxu0
    %v1923 = vadd.f32 %v1729, %v1922
    %v1924 = vpop.f32.mrb[0].mxu0
    %v1925 = vadd.f32 %v1734, %v1924
    %v1926 = vpop.f32.mrb[0].mxu0
    %v1927 = vadd.f32 %v1734, %v1926
    %1928 = vmatprep.mubr.bf16.mxu0 %v1809
    %1929 = vmatmul.mubr.bf16.gmra.mrb[0].mxu0 %v1808
    %v1930 = vpop.f32.mrb[0].mxu0
    %v1931 = vadd.f32 %v1739, %v1930
    %v1932 = vpop.f32.mrb[0].mxu0
    %v1933 = vadd.f32 %v1739, %v1932
    %v1934 = vpop.f32.mrb[0].mxu0
    %v1935 = vadd.f32 %v1744, %v1934
    %v1936 = vpop.f32.mrb[0].mxu0
    %v1937 = vadd.f32 %v1744, %v1936
    %1938 = vdwg.mxu0
    %1939 = vmatprep.subr.bf16.mxu0 0
    %1940 = vmatpush1.bf16.msra.mxu0 %v1604
    %1941 = vmatprep.subr.bf16.mxu0 0
    %1942 = vmatpush1.bf16.msra.mxu0 %v1607
    %1943 = vmatprep.subr.bf16.mxu0 0
    %1944 = vmatpush1.bf16.msra.mxu0 %v1610
    %1945 = vmatprep.subr.bf16.mxu0 0
    %1946 = vmatpush1.bf16.msra.mxu0 %v1613
    %1947 = vmatprep.subr.bf16.mxu0 0
    %1948 = vmatpush1.bf16.msra.mxu0 %v1616
    %1949 = vmatprep.subr.bf16.mxu0 0
    %1950 = vmatpush1.bf16.msra.mxu0 %v1619
    %1951 = vmatprep.subr.bf16.mxu0 0
    %1952 = vmatpush1.bf16.msra.mxu0 %v1622
    %1953 = vmatprep.subr.bf16.mxu0 0
    %1954 = vmatpush1.bf16.msra.mxu0 %v1625
    %1955 = vmatprep.subr.bf16.mxu0 0
    %1956 = vmatpush1.bf16.msra.mxu0 %v1628
    %1957 = vmatprep.subr.bf16.mxu0 0
    %1958 = vmatpush1.bf16.msra.mxu0 %v1631
    %1959 = vmatprep.subr.bf16.mxu0 0
    %1960 = vmatpush1.bf16.msra.mxu0 %v1634
    %1961 = vmatprep.subr.bf16.mxu0 0
    %1962 = vmatpush1.bf16.msra.mxu0 %v1637
    %1963 = vmatprep.subr.bf16.mxu0 0
    %1964 = vmatpush1.bf16.msra.mxu0 %v1640
    %1965 = vmatprep.subr.bf16.mxu0 0
    %1966 = vmatpush1.bf16.msra.mxu0 %v1643
    %1967 = vmatprep.subr.bf16.mxu0 0
    %1968 = vmatpush1.bf16.msra.mxu0 %v1646
    %1969 = vmatprep.subr.bf16.mxu0 0
    %1970 = vmatpush1.bf16.msra.mxu0 %v1649
    %1971 = vmatprep.mubr.bf16.mxu0 %v1795
    %1972 = vmatmul.mubr.bf16.gmra.mrb[0].mxu0 %v1794
    %v1973 = vpop.f32.mrb[0].mxu0
    %v1974 = vadd.f32 %v1669, %v1973
    %v1975 = vpop.f32.mrb[0].mxu0
    %v1976 = vpop.f32.mrb[0].mxu0
    %v1977 = vadd.f32 %v1674, %v1976
    %v1978 = vpop.f32.mrb[0].mxu0
    %1979 = vmatprep.mubr.bf16.mxu0 %v1797
    %1980 = vmatmul.mubr.bf16.gmra.mrb[0].mxu0 %v1796
    %v1981 = vpop.f32.mrb[0].mxu0
    %v1982 = vadd.f32 %v1679, %v1981
    %v1983 = vpop.f32.mrb[0].mxu0
    %v1984 = vpop.f32.mrb[0].mxu0
    %v1985 = vadd.f32 %v1684, %v1984
    %v1986 = vpop.f32.mrb[0].mxu0
    %1987 = vmatprep.mubr.bf16.mxu0 %v1799
    %1988 = vmatmul.mubr.bf16.gmra.mrb[0].mxu0 %v1798
    %v1989 = vpop.f32.mrb[0].mxu0
    %v1990 = vadd.f32 %v1689, %v1989
    %v1991 = vpop.f32.mrb[0].mxu0
    %v1992 = vpop.f32.mrb[0].mxu0
    %v1993 = vadd.f32 %v1694, %v1992
    %v1994 = vpop.f32.mrb[0].mxu0
    %1995 = vmatprep.mubr.bf16.mxu0 %v1801
    %1996 = vmatmul.mubr.bf16.gmra.mrb[0].mxu0 %v1800
    %v1997 = vpop.f32.mrb[0].mxu0
    %v1998 = vadd.f32 %v1699, %v1997
    %v1999 = vpop.f32.mrb[0].mxu0
    %v2000 = vpop.f32.mrb[0].mxu0
    %v2001 = vadd.f32 %v1704, %v2000
    %v2002 = vpop.f32.mrb[0].mxu0
    %2003 = vmatprep.mubr.bf16.mxu0 %v1803
    %2004 = vmatmul.mubr.bf16.gmra.mrb[0].mxu0 %v1802
    %v2005 = vpop.f32.mrb[0].mxu0
    %v2006 = vadd.f32 %v1709, %v2005
    %v2007 = vpop.f32.mrb[0].mxu0
    %v2008 = vpop.f32.mrb[0].mxu0
    %v2009 = vadd.f32 %v1714, %v2008
    %v2010 = vpop.f32.mrb[0].mxu0
    %2011 = vmatprep.mubr.bf16.mxu0 %v1805
    %2012 = vmatmul.mubr.bf16.gmra.mrb[0].mxu0 %v1804
    %v2013 = vpop.f32.mrb[0].mxu0
    %v2014 = vadd.f32 %v1719, %v2013
    %v2015 = vpop.f32.mrb[0].mxu0
    %v2016 = vpop.f32.mrb[0].mxu0
    %v2017 = vadd.f32 %v1724, %v2016
    %v2018 = vpop.f32.mrb[0].mxu0
    %2019 = vmatprep.mubr.bf16.mxu0 %v1807
    %2020 = vmatmul.mubr.bf16.gmra.mrb[0].mxu0 %v1806
    %v2021 = vpop.f32.mrb[0].mxu0
    %v2022 = vadd.f32 %v1729, %v2021
    %v2023 = vpop.f32.mrb[0].mxu0
    %v2024 = vpop.f32.mrb[0].mxu0
    %v2025 = vadd.f32 %v1734, %v2024
    %v2026 = vpop.f32.mrb[0].mxu0
    %2027 = vmatprep.mubr.bf16.mxu0 %v1809
    %2028 = vmatmul.mubr.bf16.gmra.mrb[0].mxu0 %v1808
    %v2029 = vpop.f32.mrb[0].mxu0
    %v2030 = vadd.f32 %v1739, %v2029
    %v2031 = vpop.f32.mrb[0].mxu0
    %v2032 = vpop.f32.mrb[0].mxu0
    %v2033 = vadd.f32 %v1744, %v2032
    %v2034 = vpop.f32.mrb[0].mxu0
    %2035 = vdwg.mxu0
    %vm2036 = vcmp.gt.f32.partialorder %v1861, 0.0
    %vm2037 = vcmp.gt.f32.partialorder %v1863, 0.0
    %vm2038 = vcmp.gt.f32.partialorder %v1974, 0.0
    %vm2039 = vcmp.gt.f32.partialorder %v1865, 0.0
    %vm2040 = vcmp.gt.f32.partialorder %v1867, 0.0
    %vm2041 = vcmp.gt.f32.partialorder %v1977, 0.0
    %vm2042 = vcmp.gt.f32.partialorder %v1871, 0.0
    %vm2043 = vcmp.gt.f32.partialorder %v1873, 0.0
    %vm2044 = vcmp.gt.f32.partialorder %v1982, 0.0
    %vm2045 = vcmp.gt.f32.partialorder %v1875, 0.0
    %vm2046 = vcmp.gt.f32.partialorder %v1877, 0.0
    %vm2047 = vcmp.gt.f32.partialorder %v1985, 0.0
    %vm2048 = vcmp.gt.f32.partialorder %v1881, 0.0
    %vm2049 = vcmp.gt.f32.partialorder %v1883, 0.0
    %vm2050 = vcmp.gt.f32.partialorder %v1990, 0.0
    %vm2051 = vcmp.gt.f32.partialorder %v1885, 0.0
    %vm2052 = vcmp.gt.f32.partialorder %v1887, 0.0
    %vm2053 = vcmp.gt.f32.partialorder %v1993, 0.0
    %vm2054 = vcmp.gt.f32.partialorder %v1891, 0.0
    %vm2055 = vcmp.gt.f32.partialorder %v1893, 0.0
    %vm2056 = vcmp.gt.f32.partialorder %v1998, 0.0
    %vm2057 = vcmp.gt.f32.partialorder %v1895, 0.0
    %vm2058 = vcmp.gt.f32.partialorder %v1897, 0.0
    %vm2059 = vcmp.gt.f32.partialorder %v2001, 0.0
    %vm2060 = vcmp.gt.f32.partialorder %v1901, 0.0
    %vm2061 = vcmp.gt.f32.partialorder %v1903, 0.0
    %vm2062 = vcmp.gt.f32.partialorder %v2006, 0.0
    %vm2063 = vcmp.gt.f32.partialorder %v1905, 0.0
    %vm2064 = vcmp.gt.f32.partialorder %v1907, 0.0
    %vm2065 = vcmp.gt.f32.partialorder %v2009, 0.0
    %vm2066 = vcmp.gt.f32.partialorder %v1911, 0.0
    %vm2067 = vcmp.gt.f32.partialorder %v1913, 0.0
    %vm2068 = vcmp.gt.f32.partialorder %v2014, 0.0
    %vm2069 = vcmp.gt.f32.partialorder %v1915, 0.0
    %vm2070 = vcmp.gt.f32.partialorder %v1917, 0.0
    %vm2071 = vcmp.gt.f32.partialorder %v2017, 0.0
    %vm2072 = vcmp.gt.f32.partialorder %v1921, 0.0
    %vm2073 = vcmp.gt.f32.partialorder %v1923, 0.0
    %vm2074 = vcmp.gt.f32.partialorder %v2022, 0.0
    %vm2075 = vcmp.gt.f32.partialorder %v1925, 0.0
    %vm2076 = vcmp.gt.f32.partialorder %v1927, 0.0
    %vm2077 = vcmp.gt.f32.partialorder %v2025, 0.0
    %vm2078 = vcmp.gt.f32.partialorder %v1931, 0.0
    %vm2079 = vcmp.gt.f32.partialorder %v1933, 0.0
    %vm2080 = vcmp.gt.f32.partialorder %v2030, 0.0
    %vm2081 = vcmp.gt.f32.partialorder %v1935, 0.0
    %vm2082 = vcmp.gt.f32.partialorder %v1937, 0.0
    %vm2083 = vcmp.gt.f32.partialorder %v2033, 0.0
    %v2084 = vmul.f32 %v1861, 0.2
    %v2085 = vmul.f32 %v1863, 0.2
    %v2086 = vmul.f32 %v1974, 0.2
    %v2087 = vmul.f32 %v1865, 0.2
    %v2088 = vmul.f32 %v1867, 0.2
    %v2089 = vmul.f32 %v1977, 0.2
    %v2090 = vmul.f32 %v1871, 0.2
    %v2091 = vmul.f32 %v1873, 0.2
    %v2092 = vmul.f32 %v1982, 0.2
    %v2093 = vmul.f32 %v1875, 0.2
    %v2094 = vmul.f32 %v1877, 0.2
    %v2095 = vmul.f32 %v1985, 0.2
    %v2096 = vmul.f32 %v1881, 0.2
    %v2097 = vmul.f32 %v1883, 0.2
    %v2098 = vmul.f32 %v1990, 0.2
    %v2099 = vmul.f32 %v1885, 0.2
    %v2100 = vmul.f32 %v1887, 0.2
    %v2101 = vmul.f32 %v1993, 0.2
    %v2102 = vmul.f32 %v1891, 0.2
    %v2103 = vmul.f32 %v1893, 0.2
    %v2104 = vmul.f32 %v1998, 0.2
    %v2105 = vmul.f32 %v1895, 0.2
    %v2106 = vmul.f32 %v1897, 0.2
    %v2107 = vmul.f32 %v2001, 0.2
    %v2108 = vmul.f32 %v1901, 0.2
    %v2109 = vmul.f32 %v1903, 0.2
    %v2110 = vmul.f32 %v2006, 0.2
    %v2111 = vmul.f32 %v1905, 0.2
    %v2112 = vmul.f32 %v1907, 0.2
    %v2113 = vmul.f32 %v2009, 0.2
    %v2114 = vmul.f32 %v1911, 0.2
    %v2115 = vmul.f32 %v1913, 0.2
    %v2116 = vmul.f32 %v2014, 0.2
    %v2117 = vmul.f32 %v1915, 0.2
    %v2118 = vmul.f32 %v1917, 0.2
    %v2119 = vmul.f32 %v2017, 0.2
    %v2120 = vmul.f32 %v1921, 0.2
    %v2121 = vmul.f32 %v1923, 0.2
    %v2122 = vmul.f32 %v2022, 0.2
    %v2123 = vmul.f32 %v1925, 0.2
    %v2124 = vmul.f32 %v1927, 0.2
    %v2125 = vmul.f32 %v2025, 0.2
    %v2126 = vmul.f32 %v1931, 0.2
    %v2127 = vmul.f32 %v1933, 0.2
    %v2128 = vmul.f32 %v2030, 0.2
    %v2129 = vmul.f32 %v1935, 0.2
    %v2130 = vmul.f32 %v1937, 0.2
    %v2131 = vmul.f32 %v2033, 0.2
    %v2132 = vsel %vm2036, %v1861, %v2084
    %v2133 = vsel %vm2037, %v1863, %v2085
    %v2134 = vsel %vm2038, %v1974, %v2086
    %v2135 = vsel %vm2039, %v1865, %v2087
    %v2136 = vsel %vm2040, %v1867, %v2088
    %v2137 = vsel %vm2041, %v1977, %v2089
    %v2138 = vsel %vm2042, %v1871, %v2090
    %v2139 = vsel %vm2043, %v1873, %v2091
    %v2140 = vsel %vm2044, %v1982, %v2092
    %v2141 = vsel %vm2045, %v1875, %v2093
    %v2142 = vsel %vm2046, %v1877, %v2094
    %v2143 = vsel %vm2047, %v1985, %v2095
    %v2144 = vsel %vm2048, %v1881, %v2096
    %v2145 = vsel %vm2049, %v1883, %v2097
    %v2146 = vsel %vm2050, %v1990, %v2098
    %v2147 = vsel %vm2051, %v1885, %v2099
    %v2148 = vsel %vm2052, %v1887, %v2100
    %v2149 = vsel %vm2053, %v1993, %v2101
    %v2150 = vsel %vm2054, %v1891, %v2102
    %v2151 = vsel %vm2055, %v1893, %v2103
    %v2152 = vsel %vm2056, %v1998, %v2104
    %v2153 = vsel %vm2057, %v1895, %v2105
    %v2154 = vsel %vm2058, %v1897, %v2106
    %v2155 = vsel %vm2059, %v2001, %v2107
    %v2156 = vsel %vm2060, %v1901, %v2108
    %v2157 = vsel %vm2061, %v1903, %v2109
    %v2158 = vsel %vm2062, %v2006, %v2110
    %v2159 = vsel %vm2063, %v1905, %v2111
    %v2160 = vsel %vm2064, %v1907, %v2112
    %v2161 = vsel %vm2065, %v2009, %v2113
    %v2162 = vsel %vm2066, %v1911, %v2114
    %v2163 = vsel %vm2067, %v1913, %v2115
    %v2164 = vsel %vm2068, %v2014, %v2116
    %v2165 = vsel %vm2069, %v1915, %v2117
    %v2166 = vsel %vm2070, %v1917, %v2118
    %v2167 = vsel %vm2071, %v2017, %v2119
    %v2168 = vsel %vm2072, %v1921, %v2120
    %v2169 = vsel %vm2073, %v1923, %v2121
    %v2170 = vsel %vm2074, %v2022, %v2122
    %v2171 = vsel %vm2075, %v1925, %v2123
    %v2172 = vsel %vm2076, %v1927, %v2124
    %v2173 = vsel %vm2077, %v2025, %v2125
    %v2174 = vsel %vm2078, %v1931, %v2126
    %v2175 = vsel %vm2079, %v1933, %v2127
    %v2176 = vsel %vm2080, %v2030, %v2128
    %v2177 = vsel %vm2081, %v1935, %v2129
    %v2178 = vsel %vm2082, %v1937, %v2130
    %v2179 = vsel %vm2083, %v2033, %v2131
    %v2180 = vld [vmem:[%s5] sm:$0xff]
    %v2181 = vld [vmem:[%s5 + $0x8] sm:$0xff]
    %v2182 = vld [vmem:[%s5 + $0x10] sm:$0xff]
    %v2183 = vld [vmem:[%s5 + $0x18] sm:$0xff]
    %v2184 = vld [vmem:[%s5 + $0x20] sm:$0xff]
    %v2185 = vld [vmem:[%s5 + $0x28] sm:$0xff]
    %v2186 = vld [vmem:[%s5 + $0x30] sm:$0xff]
    %v2187 = vld [vmem:[%s5 + $0x38] sm:$0xff]
    %v2188 = vld [vmem:[%s5 + $0x40] sm:$0xff]
    %v2189 = vld [vmem:[%s5 + $0x48] sm:$0xff]
    %v2190 = vld [vmem:[%s5 + $0x50] sm:$0xff]
    %v2191 = vld [vmem:[%s5 + $0x58] sm:$0xff]
    %v2192 = vld [vmem:[%s5 + $0x60] sm:$0xff]
    %v2193 = vld [vmem:[%s5 + $0x68] sm:$0xff]
    %v2194 = vld [vmem:[%s5 + $0x70] sm:$0xff]
    %v2195 = vld [vmem:[%s5 + $0x78] sm:$0xff]
    %2197 = vset.pattern.permute.xlu0 0
    %2198 = vperm.xlu0 %2197, %v2180
    %v2199 = vpop.permute.xlu0 %2198
    %2202 = vset.pattern.permute.xlu0 0
    %2203 = vperm.xlu0 %2202, %v2181
    %v2204 = vpop.permute.xlu0 %2203
    %2207 = vset.pattern.permute.xlu0 0
    %2208 = vperm.xlu0 %2207, %v2182
    %v2209 = vpop.permute.xlu0 %2208
    %2212 = vset.pattern.permute.xlu0 0
    %2213 = vperm.xlu0 %2212, %v2183
    %v2214 = vpop.permute.xlu0 %2213
    %2217 = vset.pattern.permute.xlu0 0
    %2218 = vperm.xlu0 %2217, %v2184
    %v2219 = vpop.permute.xlu0 %2218
    %2222 = vset.pattern.permute.xlu0 0
    %2223 = vperm.xlu0 %2222, %v2185
    %v2224 = vpop.permute.xlu0 %2223
    %2227 = vset.pattern.permute.xlu0 0
    %2228 = vperm.xlu0 %2227, %v2186
    %v2229 = vpop.permute.xlu0 %2228
    %2232 = vset.pattern.permute.xlu0 0
    %2233 = vperm.xlu0 %2232, %v2187
    %v2234 = vpop.permute.xlu0 %2233
    %2237 = vset.pattern.permute.xlu0 0
    %2238 = vperm.xlu0 %2237, %v2188
    %v2239 = vpop.permute.xlu0 %2238
    %2242 = vset.pattern.permute.xlu0 0
    %2243 = vperm.xlu0 %2242, %v2189
    %v2244 = vpop.permute.xlu0 %2243
    %2247 = vset.pattern.permute.xlu0 0
    %2248 = vperm.xlu0 %2247, %v2190
    %v2249 = vpop.permute.xlu0 %2248
    %2252 = vset.pattern.permute.xlu0 0
    %2253 = vperm.xlu0 %2252, %v2191
    %v2254 = vpop.permute.xlu0 %2253
    %2257 = vset.pattern.permute.xlu0 0
    %2258 = vperm.xlu0 %2257, %v2192
    %v2259 = vpop.permute.xlu0 %2258
    %2262 = vset.pattern.permute.xlu0 0
    %2263 = vperm.xlu0 %2262, %v2193
    %v2264 = vpop.permute.xlu0 %2263
    %2267 = vset.pattern.permute.xlu0 0
    %2268 = vperm.xlu0 %2267, %v2194
    %v2269 = vpop.permute.xlu0 %2268
    %2272 = vset.pattern.permute.xlu0 0
    %2273 = vperm.xlu0 %2272, %v2195
    %v2274 = vpop.permute.xlu0 %2273
    %v2276 = vmul.f32 %v2132, %v2199
    %v2277 = vmul.f32 %v2133, %v2199
    %v2278 = vmul.f32 %v2134, %v2199
    %v2279 = vmul.f32 %v2135, %v2204
    %v2280 = vmul.f32 %v2136, %v2204
    %v2281 = vmul.f32 %v2137, %v2204
    %v2282 = vmul.f32 %v2138, %v2209
    %v2283 = vmul.f32 %v2139, %v2209
    %v2284 = vmul.f32 %v2140, %v2209
    %v2285 = vmul.f32 %v2141, %v2214
    %v2286 = vmul.f32 %v2142, %v2214
    %v2287 = vmul.f32 %v2143, %v2214
    %v2288 = vmul.f32 %v2144, %v2219
    %v2289 = vmul.f32 %v2145, %v2219
    %v2290 = vmul.f32 %v2146, %v2219
    %v2291 = vmul.f32 %v2147, %v2224
    %v2292 = vmul.f32 %v2148, %v2224
    %v2293 = vmul.f32 %v2149, %v2224
    %v2294 = vmul.f32 %v2150, %v2229
    %v2295 = vmul.f32 %v2151, %v2229
    %v2296 = vmul.f32 %v2152, %v2229
    %v2297 = vmul.f32 %v2153, %v2234
    %v2298 = vmul.f32 %v2154, %v2234
    %v2299 = vmul.f32 %v2155, %v2234
    %v2300 = vmul.f32 %v2156, %v2239
    %v2301 = vmul.f32 %v2157, %v2239
    %v2302 = vmul.f32 %v2158, %v2239
    %v2303 = vmul.f32 %v2159, %v2244
    %v2304 = vmul.f32 %v2160, %v2244
    %v2305 = vmul.f32 %v2161, %v2244
    %v2306 = vmul.f32 %v2162, %v2249
    %v2307 = vmul.f32 %v2163, %v2249
    %v2308 = vmul.f32 %v2164, %v2249
    %v2309 = vmul.f32 %v2165, %v2254
    %v2310 = vmul.f32 %v2166, %v2254
    %v2311 = vmul.f32 %v2167, %v2254
    %v2312 = vmul.f32 %v2168, %v2259
    %v2313 = vmul.f32 %v2169, %v2259
    %v2314 = vmul.f32 %v2170, %v2259
    %v2315 = vmul.f32 %v2171, %v2264
    %v2316 = vmul.f32 %v2172, %v2264
    %v2317 = vmul.f32 %v2173, %v2264
    %v2318 = vmul.f32 %v2174, %v2269
    %v2319 = vmul.f32 %v2175, %v2269
    %v2320 = vmul.f32 %v2176, %v2269
    %v2321 = vmul.f32 %v2177, %v2274
    %v2322 = vmul.f32 %v2178, %v2274
    %v2323 = vmul.f32 %v2179, %v2274
    %v2324 = vadd.f32 %v2276, %v2279
    %v2325 = vadd.f32 %v2324, %v2282
    %v2326 = vadd.f32 %v2325, %v2285
    %v2327 = vadd.f32 %v2326, %v2288
    %v2328 = vadd.f32 %v2327, %v2291
    %v2329 = vadd.f32 %v2328, %v2294
    %v2330 = vadd.f32 %v2329, %v2297
    %v2331 = vadd.f32 %v2330, %v2300
    %v2332 = vadd.f32 %v2331, %v2303
    %v2333 = vadd.f32 %v2332, %v2306
    %v2334 = vadd.f32 %v2333, %v2309
    %v2335 = vadd.f32 %v2334, %v2312
    %v2336 = vadd.f32 %v2335, %v2315
    %v2337 = vadd.f32 %v2336, %v2318
    %v2338 = vadd.f32 %v2337, %v2321
    %v2339 = vrot.slane %v2338, 4
    %v2340 = vadd.f32 %v2338, %v2339
    %v2341 = vrot.slane %v2340, 2
    %v2342 = vadd.f32 %v2340, %v2341
    %v2343 = vrot.slane %v2342, 1
    %v2344 = vadd.f32 %v2342, %v2343
    %v2345 = vadd.f32 %v2277, %v2280
    %v2346 = vadd.f32 %v2345, %v2283
    %v2347 = vadd.f32 %v2346, %v2286
    %v2348 = vadd.f32 %v2347, %v2289
    %v2349 = vadd.f32 %v2348, %v2292
    %v2350 = vadd.f32 %v2349, %v2295
    %v2351 = vadd.f32 %v2350, %v2298
    %v2352 = vadd.f32 %v2351, %v2301
    %v2353 = vadd.f32 %v2352, %v2304
    %v2354 = vadd.f32 %v2353, %v2307
    %v2355 = vadd.f32 %v2354, %v2310
    %v2356 = vadd.f32 %v2355, %v2313
    %v2357 = vadd.f32 %v2356, %v2316
    %v2358 = vadd.f32 %v2357, %v2319
    %v2359 = vadd.f32 %v2358, %v2322
    %v2360 = vrot.slane %v2359, 4
    %v2361 = vadd.f32 %v2359, %v2360
    %v2362 = vrot.slane %v2361, 2
    %v2363 = vadd.f32 %v2361, %v2362
    %v2364 = vrot.slane %v2363, 1
    %v2365 = vadd.f32 %v2363, %v2364
    %v2366 = vadd.f32 %v2278, %v2281
    %v2367 = vadd.f32 %v2366, %v2284
    %v2368 = vadd.f32 %v2367, %v2287
    %v2369 = vadd.f32 %v2368, %v2290
    %v2370 = vadd.f32 %v2369, %v2293
    %v2371 = vadd.f32 %v2370, %v2296
    %v2372 = vadd.f32 %v2371, %v2299
    %v2373 = vadd.f32 %v2372, %v2302
    %v2374 = vadd.f32 %v2373, %v2305
    %v2375 = vadd.f32 %v2374, %v2308
    %v2376 = vadd.f32 %v2375, %v2311
    %v2377 = vadd.f32 %v2376, %v2314
    %v2378 = vadd.f32 %v2377, %v2317
    %v2379 = vadd.f32 %v2378, %v2320
    %v2380 = vadd.f32 %v2379, %v2323
    %v2381 = vrot.slane %v2380, 4
    %v2382 = vadd.f32 %v2380, %v2381
    %v2383 = vrot.slane %v2382, 2
    %v2384 = vadd.f32 %v2382, %v2383
    %v2385 = vrot.slane %v2384, 1
    %v2386 = vadd.f32 %v2384, %v2385
    %s2387 = sld [smem:[#allocation2]]
    %v2388 = vstv %s2387
    %v2389 = vadd.f32 %v2344, %v2388
    %v2390 = vadd.f32 %v2365, %v2388
    %v2391 = vadd.f32 %v2386, %v2388
    %v2392 = vsub.f32 0.0, %v2389
    %v2393 = vsub.f32 0.0, %v2390
    %v2394 = vsub.f32 0.0, %v2391
    %v2395 = vmul.f32 %v2392, 1.442695
    %v2396 = vpow.pop %v2395
    %v2397 = vmul.f32 %v2393, 1.442695
    %v2398 = vpow.pop %v2397
    %v2399 = vmul.f32 %v2394, 1.442695
    %v2400 = vpow.pop %v2399
    %v2401 = vadd.f32 %v2396, 1.0
    %v2402 = vadd.f32 %v2398, 1.0
    %v2403 = vadd.f32 %v2400, 1.0
    %v2404 = vrcp.pop %v2401
    %v2405 = vmul.f32 1.0, %v2404
    %v2406 = vrcp.pop %v2402
    %v2407 = vmul.f32 1.0, %v2406
    %v2408 = vrcp.pop %v2403
    %v2409 = vmul.f32 1.0, %v2408
    %v2413 = vcombine.low %v2405, %v2407
    %v2415 = vunpack.c.l.s4 1966171168
    %v2416 = vunpack.c.0.s8 %v2415
    %v2417 = vlaneseq
    %v2418 = vshrl.u32 %v2417, 7
    %v2419 = vsub.s32 %v2416, %v2418
    %v2420 = vrot.slane %v2413, %v2419
    %v2422 = vunpack.c.l.s4 1966171168
    %v2423 = vunpack.c.0.s8 %v2422
    %v2424 = vlaneseq
    %v2425 = vshrl.u32 %v2424, 7
    %v2426 = vsub.s32 %v2423, %v2425
    %v2427 = vrot.slane %v2409, %v2426
    %v2428 = vcombine.low %v2420, %v2427
    %v2430 = vunpack.c.l.s4 1966171168
    %v2431 = vunpack.c.0.s8 %v2430
    %v2432 = vlaneseq
    %v2433 = vshrl.u32 %v2432, 7
    %v2434 = vsub.s32 %v2431, %v2433
    %v2435 = vrot.slane %v2428, %v2434
    %v2437 = vlaneseq
    %vm2438 = vcmp.ge.s32.totalorder %v2437, 0
    %vm2439 = vcmp.lt.s32.totalorder %v2437, 384
    %vm2440 = vmand %vm2438, %vm2439
    %2441 = vst.msk [vmem:[#allocation3] sm:$0x7] %vm2440, %v2435
    // Predicated region
    $region30: #{tpu_custom_call.1} parent=1 // pred_check
      _
    $region31: #{tpu_custom_call.1} parent=1 // pred_check_branch
      %2443 = sbr.rel (0) target = $region33
    $region32: #{tpu_custom_call.1} parent=1 // pred_region
      %s2445 = ssub.s32 48, 48
      %2446 = vsyncadd [#allocation4], %s2445
      %s2448 = sshll.u32 [#allocation3], 4
      %s2449 = int_to_ptr.vmem [resolvable:$true] %s2448
      %2451 = dma.vmem_to_hbm [thread:$0]  %s2449, 48, %s7, [#allocation4]
    $region33: #{tpu_custom_call.1} parent=1 // pred_fallthru
      _
    // Predicated region
    $region34: #{tpu_custom_call.1} parent=1 // pred_check
      _
    $region35: #{tpu_custom_call.1} parent=1 // pred_check_branch
      %2453 = sbr.rel (0) target = $region37
    $region36: #{tpu_custom_call.1} parent=1 // pred_region
      %2454 = dma.done [#allocation4], 48
    $region37: #{tpu_custom_call.1} parent=1 // pred_fallthru
      _
    %2455 = vsyncpa [#allocation4], 1

</llo_original>
